<compile_context>
chip_gen: v7x
topology: tpu7x:2x2x1
jax: 0.10.0
libtpu: 0.0.40
codegen_flags: <defaults>
</compile_context>

<pallas_src>
import jax
import jax.numpy as jnp
from jax.experimental import pallas as pl
from jax.experimental.pallas import tpu as pltpu


# ----------------------------------------------------------------------------- kernel
def hgru4rec_kernel(ids_ref,                                   # SMEM (T, Bp) int32 (scalar prefetch)
                    srepr0_ref, urepr0_ref,                    # (BLK_B, Hp) initial states
                    smask_ref, umask_ref,                      # (BLK_B, 1) per-step masks
                    ug_w_ref, ug_b_ref,                        # (2Hp, 4Hp) bf16, (1, 4Hp) f32
                    u2s_w_ref, u2s_b_ref,                      # (Hp, Hp) bf16, (1, Hp) f32
                    sg_wih_ref, sg_bih_ref,                    # (Vp, 3Hp) f32, (1, 3Hp) f32
                    sg_whh_ref, sg_bhh_ref,                    # (Hp, 3Hp) bf16, (1, 3Hp) f32
                    s2o_w_ref, s2o_b_ref,                      # (Hp, OUTp) bf16, (1, OUTp) f32
                    score_ref, sess_ref, user_ref,             # outputs
                    gi_scratch_ref):                           # VMEM (BLK_B, 3Hp) f32
    b_blk = pl.program_id(0)
    t = pl.program_id(1)
    BLK_B, Hp = sess_ref.shape

    # Initialize the resident recurrent state on the first timestep of each batch block.
    @pl.when(t == 0)
    def _():
        sess_ref[...] = srepr0_ref[...]
        user_ref[...] = urepr0_ref[...]

    session_repr = sess_ref[...]                               # (BLK_B, Hp) f32
    user_repr = user_ref[...]
    s_mask = smask_ref[...]                                    # (BLK_B, 1)
    u_mask = umask_ref[...]

    # ---- user GRU: ONE fused MXU dot on [x | h] yields [r | z | gi_n | gh_n] ----
    xh = jnp.concatenate([session_repr, user_repr], axis=1).astype(jnp.bfloat16)
    g = jnp.dot(xh, ug_w_ref[...], preferred_element_type=jnp.float32) + ug_b_ref[...]
    r_u = jax.nn.sigmoid(g[:, :Hp])
    z_u = jax.nn.sigmoid(g[:, Hp:2 * Hp])
    n_u = jnp.tanh(g[:, 2 * Hp:3 * Hp] + r_u * g[:, 3 * Hp:])
    user_upd = (1.0 - z_u) * n_u + z_u * user_repr
    # TODO(synk): nn.Dropout layers are identity in eval mode; training-mode dropout not implemented.
    user_repr = s_mask * user_upd + (1.0 - s_mask) * user_repr
    user_repr = (1.0 - u_mask) * user_repr                     # user_mask*zeros + (1-user_mask)*repr

    # ---- u2s: Linear + Tanh (+ Dropout == identity) ----
    sess_init = jnp.tanh(
        jnp.dot(user_repr.astype(jnp.bfloat16), u2s_w_ref[...],
                preferred_element_type=jnp.float32) + u2s_b_ref[...])
    session_repr = s_mask * sess_init + (1.0 - s_mask) * session_repr
    session_repr = (1.0 - u_mask) * session_repr

    # ---- session GRU: one_hot(input) @ W_ih^T == row gather of W_ih^T ----
    # BLK_B is small & static -> unrolled dynamic-sublane row copies.
    for bb in range(BLK_B):
        item = ids_ref[t, b_blk * BLK_B + bb]
        gi_scratch_ref[pl.ds(bb, 1), :] = sg_wih_ref[pl.ds(item, 1), :]
    gi_s = gi_scratch_ref[...] + sg_bih_ref[...]
    gh_s = jnp.dot(session_repr.astype(jnp.bfloat16), sg_whh_ref[...],
                   preferred_element_type=jnp.float32) + sg_bhh_ref[...]
    r_s = jax.nn.sigmoid(gi_s[:, :Hp] + gh_s[:, :Hp])
    z_s = jax.nn.sigmoid(gi_s[:, Hp:2 * Hp] + gh_s[:, Hp:2 * Hp])
    n_s = jnp.tanh(gi_s[:, 2 * Hp:] + r_s * gh_s[:, 2 * Hp:])
    session_repr = (1.0 - z_s) * n_s + z_s * session_repr

    # ---- s2o: Linear + Tanh ----
    score = jnp.tanh(
        jnp.dot(session_repr.astype(jnp.bfloat16), s2o_w_ref[...],
                preferred_element_type=jnp.float32) + s2o_b_ref[...])

    score_ref[...] = score
    sess_ref[...] = session_repr
    user_ref[...] = user_repr


# ----------------------------------------------------------------------------- wrapper
def _round_up(x, m):
    return (x + m - 1) // m * m


def _gru_w_t_padded(w, h, hp, din, din_p):
    """Torch GRUCell weight (3h, din) -> (din_p, 3*hp)^T with gate g in lanes [g*hp, g*hp+h)."""
    gates = jnp.split(w, 3, axis=0)
    cols = [jnp.pad(g.T, ((0, din_p - din), (0, hp - h))) for g in gates]
    return jnp.concatenate(cols, axis=1)


def _gru_b_padded(b, h, hp):
    gates = jnp.split(b, 3)
    return jnp.concatenate([jnp.pad(g, (0, hp - h)) for g in gates])[None, :]


def _build_user_gru_fused(w_ih, w_hh, b_ih, b_hh, h, hp, bf16):
    """Fused user-GRU weight: [x|h] @ W -> columns [r | z | gi_n | gh_n] (each hp lanes)."""
    wi_r, wi_z, wi_n = jnp.split(w_ih, 3, axis=0)              # each (h, h)
    wh_r, wh_z, wh_n = jnp.split(w_hh, 3, axis=0)
    bi_r, bi_z, bi_n = jnp.split(b_ih, 3)
    bh_r, bh_z, bh_n = jnp.split(b_hh, 3)

    def padw(m):
        return jnp.pad(m, ((0, hp - h), (0, hp - h)))

    zero = jnp.zeros((h, h), jnp.float32)
    top = jnp.concatenate([padw(wi_r.T), padw(wi_z.T), padw(wi_n.T), padw(zero)], axis=1)
    bot = jnp.concatenate([padw(wh_r.T), padw(wh_z.T), padw(zero), padw(wh_n.T)], axis=1)
    ug_w = jnp.concatenate([top, bot], axis=0).astype(bf16)    # (2hp, 4hp)

    def padb(v):
        return jnp.pad(v, (0, hp - h))

    ug_b = jnp.concatenate([padb(bi_r + bh_r), padb(bi_z + bh_z),
                            padb(bi_n), padb(bh_n)])[None, :]  # (1, 4hp) f32
    return ug_w, ug_b


def hgru4rec_forward(item_ids, session_repr, session_mask, user_repr, user_mask, params):
    """Runs HGRU4REC forward over a whole sequence in one pallas_call.

    item_ids:     (T, B)    int32
    session_repr: (B, H)    f32 initial session state
    session_mask: (T, B, 1) f32 per-step session-start mask
    user_repr:    (B, H)    f32 initial user state
    user_mask:    (T, B, 1) f32 per-step new-user mask
    Returns (scores (T, B, OUT), final session_repr (B, H), final user_repr (B, H)).
    """
    T, B = item_ids.shape
    H = session_repr.shape[1]
    V = params["sg_w_ih"].shape[1]
    OUT = params["s2o_w"].shape[0]

    Bp = _round_up(B, 8)
    Hp = _round_up(H, 128)
    OUTp = _round_up(OUT, 128)
    Vp = _round_up(V, 8)
    bf16 = jnp.bfloat16
    p = {k: v.astype(jnp.float32) for k, v in params.items()}

    # Batch blocking: one block per <=128 rows; leading grid axis is "parallel"
    # so large batches shard across TensorCores (v7x megacore).
    if Bp <= 128:
        blk_b = Bp
    else:
        Bp = _round_up(Bp, 128)
        blk_b = 128
    nb = Bp // blk_b

    # user GRU: fused [r | z | gi_n | gh_n] weight (exact GRUCell semantics).
    ug_w, ug_b = _build_user_gru_fused(p["ug_w_ih"], p["ug_w_hh"],
                                       p["ug_b_ih"], p["ug_b_hh"], H, Hp, bf16)

    u2s_w = jnp.pad(p["u2s_w"].T, ((0, Hp - H), (0, Hp - H))).astype(bf16)
    u2s_b = jnp.pad(p["u2s_b"], (0, Hp - H))[None, :]

    # session GRU: input weight kept f32 (it is row-gathered, never matmul'd).
    # TODO(synk): for a real (large) item vocabulary, DMA only the needed rows from HBM
    #             instead of keeping the full (V, 3Hp) table resident in VMEM.
    sg_wih_t = _gru_w_t_padded(p["sg_w_ih"], H, Hp, V, Vp)                  # (Vp, 3Hp) f32
    sg_bih = _gru_b_padded(p["sg_b_ih"], H, Hp)
    sg_whh_t = _gru_w_t_padded(p["sg_w_hh"], H, Hp, H, Hp).astype(bf16)
    sg_bhh = _gru_b_padded(p["sg_b_hh"], H, Hp)

    s2o_w = jnp.pad(p["s2o_w"].T, ((0, Hp - H), (0, OUTp - OUT))).astype(bf16)
    s2o_b = jnp.pad(p["s2o_b"], (0, OUTp - OUT))[None, :]

    ids = jnp.pad(item_ids.astype(jnp.int32), ((0, 0), (0, Bp - B)))
    srepr0 = jnp.pad(session_repr.astype(jnp.float32), ((0, Bp - B), (0, Hp - H)))
    urepr0 = jnp.pad(user_repr.astype(jnp.float32), ((0, Bp - B), (0, Hp - H)))
    smask = jnp.pad(session_mask.astype(jnp.float32), ((0, 0), (0, Bp - B), (0, 0)))
    umask = jnp.pad(user_mask.astype(jnp.float32), ((0, 0), (0, Bp - B), (0, 0)))

    def _resident(shape):
        return pl.BlockSpec(shape, lambda b, t, ids_ref: (0,) * len(shape))

    def _per_batch(shape):
        return pl.BlockSpec(shape, lambda b, t, ids_ref: (b, 0))

    def _per_step(shape):
        return pl.BlockSpec(shape, lambda b, t, ids_ref: (t, b, 0))

    grid_spec = pltpu.PrefetchScalarGridSpec(
        num_scalar_prefetch=1,
        grid=(nb, T),
        in_specs=[
            _per_batch((blk_b, Hp)),                                        # srepr0
            _per_batch((blk_b, Hp)),                                        # urepr0
            _per_step((None, blk_b, 1)),                                    # session_mask[t]
            _per_step((None, blk_b, 1)),                                    # user_mask[t]
            _resident((2 * Hp, 4 * Hp)),                                    # ug_w (fused)
            _resident((1, 4 * Hp)),                                         # ug_b
            _resident((Hp, Hp)),                                            # u2s_w
            _resident((1, Hp)),                                             # u2s_b
            _resident((Vp, 3 * Hp)),                                        # sg_w_ih^T
            _resident((1, 3 * Hp)),                                         # sg_b_ih
            _resident((Hp, 3 * Hp)),                                        # sg_w_hh^T
            _resident((1, 3 * Hp)),                                         # sg_b_hh
            _resident((Hp, OUTp)),                                          # s2o_w
            _resident((1, OUTp)),                                           # s2o_b
        ],
        out_specs=[
            _per_step((None, blk_b, OUTp)),                                 # per-step scores
            _per_batch((blk_b, Hp)),                                        # resident session state
            _per_batch((blk_b, Hp)),                                        # resident user state
        ],
        scratch_shapes=[pltpu.VMEM((blk_b, 3 * Hp), jnp.float32)],
    )

    out_shape = (
        jax.ShapeDtypeStruct((T, Bp, OUTp), jnp.float32),
        jax.ShapeDtypeStruct((Bp, Hp), jnp.float32),
        jax.ShapeDtypeStruct((Bp, Hp), jnp.float32),
    )

    scores, sess_out, user_out = pl.pallas_call(
        hgru4rec_kernel,
        grid_spec=grid_spec,
        out_shape=out_shape,
        compiler_params=pltpu.CompilerParams(
            dimension_semantics=("parallel", "arbitrary")),
    )(ids, srepr0, urepr0, smask, umask,
      ug_w, ug_b, u2s_w, u2s_b,
      sg_wih_t, sg_bih, sg_whh_t, sg_bhh, s2o_w, s2o_b)

    return scores[:, :B, :OUT], sess_out[:B, :H], user_out[:B, :H]


# ----------------------------------------------------------------------------- reference
def _dot_bf16(x, w_t):
    return jnp.dot(x.astype(jnp.bfloat16), w_t.astype(jnp.bfloat16),
                   preferred_element_type=jnp.float32)


def reference_step(item_ids, session_repr, session_mask, user_repr, user_mask, p):
    """Pure-JAX single-step forward matching the PyTorch module (eval mode).

    Matmuls use bf16 operands / f32 accumulation to mirror the kernel's MXU path.
    The one_hot(inputs) @ W_ih^T product is computed as an exact row lookup
    (mathematically identical, since the one-hot selects a single weight row).
    """
    H = session_repr.shape[1]

    def gru_gates(gi, gh, h):
        r = jax.nn.sigmoid(gi[:, :H] + gh[:, :H])
        z = jax.nn.sigmoid(gi[:, H:2 * H] + gh[:, H:2 * H])
        n = jnp.tanh(gi[:, 2 * H:] + r * gh[:, 2 * H:])
        return (1.0 - z) * n + z * h

    gi_u = _dot_bf16(session_repr, p["ug_w_ih"].T) + p["ug_b_ih"]
    gh_u = _dot_bf16(user_repr, p["ug_w_hh"].T) + p["ug_b_hh"]
    user_upd = gru_gates(gi_u, gh_u, user_repr)
    user_repr = session_mask * user_upd + (1.0 - session_mask) * user_repr
    user_repr = (1.0 - user_mask) * user_repr

    sess_init = jnp.tanh(_dot_bf16(user_repr, p["u2s_w"].T) + p["u2s_b"])
    session_repr = session_mask * sess_init + (1.0 - session_mask) * session_repr
    session_repr = (1.0 - user_mask) * session_repr

    gi_s = p["sg_w_ih"].T[item_ids] + p["sg_b_ih"]
    gh_s = _dot_bf16(session_repr, p["sg_w_hh"].T) + p["sg_b_hh"]
    session_repr = gru_gates(gi_s, gh_s, session_repr)

    score = jnp.tanh(_dot_bf16(session_repr, p["s2o_w"].T) + p["s2o_b"])
    return score, session_repr, user_repr


def init_params(key, input_size, output_size, hidden_dim, sigma=0.1):
    H = hidden_dim
    shapes = {
        "ug_w_ih": (3 * H, H), "ug_w_hh": (3 * H, H),
        "ug_b_ih": (3 * H,), "ug_b_hh": (3 * H,),
        "u2s_w": (H, H), "u2s_b": (H,),
        "sg_w_ih": (3 * H, input_size), "sg_w_hh": (3 * H, H),
        "sg_b_ih": (3 * H,), "sg_b_hh": (3 * H,),
        "s2o_w": (output_size, H), "s2o_b": (output_size,),
    }
    params = {}
    for name, shape in sorted(shapes.items()):
        key, sub = jax.random.split(key)
        params[name] = jax.random.uniform(sub, shape, jnp.float32, -sigma, sigma)
    return params


if __name__ == "__main__":
    B, V, OUT, H, T = 8, 16, 16, 32, 6

    key = jax.random.PRNGKey(0)
    k_par, k_in, k_sr, k_ur, k_sm, k_um = jax.random.split(key, 6)

    params = init_params(k_par, V, OUT, H)

    item_ids = jax.random.randint(k_in, (T, B), 0, V, dtype=jnp.int32)
    session_repr0 = jax.random.uniform(k_sr, (B, H), jnp.float32, -1.0, 1.0)
    user_repr0 = jax.random.uniform(k_ur, (B, H), jnp.float32, -1.0, 1.0)
    session_mask = jax.random.bernoulli(k_sm, 0.5, (T, B, 1)).astype(jnp.float32)
    user_mask = jax.random.bernoulli(k_um, 0.5, (T, B, 1)).astype(jnp.float32)

    scores, sess_out, user_out = jax.block_until_ready(
        hgru4rec_forward(item_ids, session_repr0, session_mask,
                         user_repr0, user_mask, params))

    # Pure-JAX reference: per-step forward unrolled over the sequence.
    ref_scores = []
    s_repr, u_repr = session_repr0, user_repr0
    for t in range(T):
        sc, s_repr, u_repr = reference_step(item_ids[t], s_repr, session_mask[t],
                                            u_repr, user_mask[t], params)
        ref_scores.append(sc)
    ref_scores = jnp.stack(ref_scores, axis=0)

    assert scores.shape == (T, B, OUT)
    assert sess_out.shape == (B, H)
    assert user_out.shape == (B, H)
    assert jnp.allclose(scores, ref_scores, atol=1e-3, rtol=1e-3), \
        float(jnp.max(jnp.abs(scores - ref_scores)))
    assert jnp.allclose(sess_out, s_repr, atol=1e-3, rtol=1e-3)
    assert jnp.allclose(user_out, u_repr, atol=1e-3, rtol=1e-3)

    print("KERNEL_OK")
</pallas_src>

<mosaic_0001>
module attributes {stable_mosaic.version = 11 : i64} {
  func.func @hgru4rec_kernel(%arg0: i32, %arg1: i32, %arg2: memref<6x8xi32, #tpu.memory_space<smem>>, %arg3: memref<8x128xf32, #tpu.memory_space<vmem>>, %arg4: memref<8x128xf32, #tpu.memory_space<vmem>>, %arg5: memref<1x8x1xf32, #tpu.memory_space<vmem>>, %arg6: memref<1x8x1xf32, #tpu.memory_space<vmem>>, %arg7: memref<256x512xbf16, #tpu.memory_space<vmem>>, %arg8: memref<1x512xf32, #tpu.memory_space<vmem>>, %arg9: memref<128x128xbf16, #tpu.memory_space<vmem>>, %arg10: memref<1x128xf32, #tpu.memory_space<vmem>>, %arg11: memref<16x384xf32, #tpu.memory_space<vmem>>, %arg12: memref<1x384xf32, #tpu.memory_space<vmem>>, %arg13: memref<128x384xbf16, #tpu.memory_space<vmem>>, %arg14: memref<1x384xf32, #tpu.memory_space<vmem>>, %arg15: memref<128x128xbf16, #tpu.memory_space<vmem>>, %arg16: memref<1x128xf32, #tpu.memory_space<vmem>>, %arg17: memref<1x8x128xf32, #tpu.memory_space<vmem>>, %arg18: memref<8x128xf32, #tpu.memory_space<vmem>>, %arg19: memref<8x128xf32, #tpu.memory_space<vmem>>, %arg20: memref<8x384xf32, #tpu.memory_space<vmem>>) attributes {dimension_semantics = [#tpu.dimension_semantics<parallel>, #tpu.dimension_semantics<arbitrary>], iteration_bounds = array<i64: 1, 6>, scalar_prefetch = 1 : i64, scratch_operands = 1 : i64, tpu.core_type = #tpu.core_type<tc>, window_params = [{transform_indices = @transform_0, window_bounds = array<i64: 8, 128>}, {transform_indices = @transform_1, window_bounds = array<i64: 8, 128>}, {transform_indices = @transform_2, window_bounds = array<i64: 1, 8, 1>}, {transform_indices = @transform_3, window_bounds = array<i64: 1, 8, 1>}, {pipeline_mode = #tpu.pipeline_mode<synchronous>, transform_indices = @transform_4, window_bounds = array<i64: 256, 512>}, {pipeline_mode = #tpu.pipeline_mode<synchronous>, transform_indices = @transform_5, window_bounds = array<i64: 1, 512>}, {pipeline_mode = #tpu.pipeline_mode<synchronous>, transform_indices = @transform_6, window_bounds = array<i64: 128, 128>}, {pipeline_mode = #tpu.pipeline_mode<synchronous>, transform_indices = @transform_7, window_bounds = array<i64: 1, 128>}, {pipeline_mode = #tpu.pipeline_mode<synchronous>, transform_indices = @transform_8, window_bounds = array<i64: 16, 384>}, {pipeline_mode = #tpu.pipeline_mode<synchronous>, transform_indices = @transform_9, window_bounds = array<i64: 1, 384>}, {pipeline_mode = #tpu.pipeline_mode<synchronous>, transform_indices = @transform_10, window_bounds = array<i64: 128, 384>}, {pipeline_mode = #tpu.pipeline_mode<synchronous>, transform_indices = @transform_11, window_bounds = array<i64: 1, 384>}, {pipeline_mode = #tpu.pipeline_mode<synchronous>, transform_indices = @transform_12, window_bounds = array<i64: 128, 128>}, {pipeline_mode = #tpu.pipeline_mode<synchronous>, transform_indices = @transform_13, window_bounds = array<i64: 1, 128>}, {transform_indices = @transform_14, window_bounds = array<i64: 1, 8, 128>}, {transform_indices = @transform_15, window_bounds = array<i64: 8, 128>}, {transform_indices = @transform_16, window_bounds = array<i64: 8, 128>}]} {
    %c0_i32 = arith.constant 0 : i32
    %0 = arith.cmpi eq, %arg1, %c0_i32 : i32
    %1 = arith.extui %0 : i1 to i32
    %c0_i32_0 = arith.constant 0 : i32
    %2 = arith.cmpi ne, %1, %c0_i32_0 : i32
    scf.if %2 {
      %c0_75 = arith.constant 0 : index
      %c0_76 = arith.constant 0 : index
      %179 = vector.load %arg3[%c0_75, %c0_76] : memref<8x128xf32, #tpu.memory_space<vmem>>, vector<8x128xf32>
      %c0_77 = arith.constant 0 : index
      %c0_78 = arith.constant 0 : index
      %180 = vector.load %arg18[%c0_77, %c0_78] : memref<8x128xf32, #tpu.memory_space<vmem>>, vector<8x128xf32>
      tpu.vector_store %arg18[%c0_77, %c0_78], %179 {strides = array<i32>} : memref<8x128xf32, #tpu.memory_space<vmem>>, vector<8x128xf32>,
      %c0_79 = arith.constant 0 : index
      %c0_80 = arith.constant 0 : index
      %181 = vector.load %arg4[%c0_79, %c0_80] : memref<8x128xf32, #tpu.memory_space<vmem>>, vector<8x128xf32>
      %c0_81 = arith.constant 0 : index
      %c0_82 = arith.constant 0 : index
      %182 = vector.load %arg19[%c0_81, %c0_82] : memref<8x128xf32, #tpu.memory_space<vmem>>, vector<8x128xf32>
      tpu.vector_store %arg19[%c0_81, %c0_82], %181 {strides = array<i32>} : memref<8x128xf32, #tpu.memory_space<vmem>>, vector<8x128xf32>,
    } else {
    }
    %c0 = arith.constant 0 : index
    %c0_1 = arith.constant 0 : index
    %3 = vector.load %arg18[%c0, %c0_1] : memref<8x128xf32, #tpu.memory_space<vmem>>, vector<8x128xf32>
    %c0_2 = arith.constant 0 : index
    %c0_3 = arith.constant 0 : index
    %4 = vector.load %arg19[%c0_2, %c0_3] : memref<8x128xf32, #tpu.memory_space<vmem>>, vector<8x128xf32>
    %c0_4 = arith.constant 0 : index
    %c0_5 = arith.constant 0 : index
    %c0_6 = arith.constant 0 : index
    %5 = vector.load %arg5[%c0_4, %c0_5, %c0_6] : memref<1x8x1xf32, #tpu.memory_space<vmem>>, vector<1x8x1xf32>
    %6 = vector.shape_cast %5 : vector<1x8x1xf32> to vector<8x1xf32>
    %c0_7 = arith.constant 0 : index
    %c0_8 = arith.constant 0 : index
    %c0_9 = arith.constant 0 : index
    %7 = vector.load %arg6[%c0_7, %c0_8, %c0_9] : memref<1x8x1xf32, #tpu.memory_space<vmem>>, vector<1x8x1xf32>
    %8 = vector.shape_cast %7 : vector<1x8x1xf32> to vector<8x1xf32>
    %9 = tpu.concatenate %3, %4 in 1 : vector<8x128xf32>, vector<8x128xf32> -> vector<8x256xf32>
    %10 = arith.truncf %9 : vector<8x256xf32> to vector<8x256xbf16>
    %c0_10 = arith.constant 0 : index
    %c0_11 = arith.constant 0 : index
    %11 = vector.load %arg7[%c0_10, %c0_11] : memref<256x512xbf16, #tpu.memory_space<vmem>>, vector<256x512xbf16>
    %cst = arith.constant dense<0.000000e+00> : vector<8x512xf32>
    %12 = tpu.matmul %10, %11, %cst {dimension_numbers = #tpu.dot_dimension_numbers<[1], [0], [0], [1], [0, 0, 1, 1], [], []>} : vector<8x256xbf16>, vector<256x512xbf16>, vector<8x512xf32> -> vector<8x512xf32>
    %c0_12 = arith.constant 0 : index
    %c0_13 = arith.constant 0 : index
    %13 = vector.load %arg8[%c0_12, %c0_13] : memref<1x512xf32, #tpu.memory_space<vmem>>, vector<1x512xf32>
    %14 = vector.broadcast %13 : vector<1x512xf32> to vector<8x512xf32>
    %15 = arith.addf %12, %14 : vector<8x512xf32>
    %16 = vector.extract_strided_slice %15 {offsets = [0, 0], sizes = [8, 128], strides = [1, 1]} : vector<8x512xf32> to vector<8x128xf32>
    %17 = arith.negf %16 : vector<8x128xf32>
    %18 = math.exp %17 : vector<8x128xf32>
    %cst_14 = arith.constant 1.000000e+00 : f32
    %19 = vector.broadcast %cst_14 : f32 to vector<8x128xf32>
    %20 = arith.addf %19, %18 : vector<8x128xf32>
    %21 = arith.divf %19, %20 : vector<8x128xf32>
    %22 = vector.extract_strided_slice %15 {offsets = [0, 128], sizes = [8, 128], strides = [1, 1]} : vector<8x512xf32> to vector<8x128xf32>
    %23 = arith.negf %22 : vector<8x128xf32>
    %24 = math.exp %23 : vector<8x128xf32>
    %cst_15 = arith.constant 1.000000e+00 : f32
    %25 = vector.broadcast %cst_15 : f32 to vector<8x128xf32>
    %26 = arith.addf %25, %24 : vector<8x128xf32>
    %27 = arith.divf %25, %26 : vector<8x128xf32>
    %28 = vector.extract_strided_slice %15 {offsets = [0, 256], sizes = [8, 128], strides = [1, 1]} : vector<8x512xf32> to vector<8x128xf32>
    %29 = vector.extract_strided_slice %15 {offsets = [0, 384], sizes = [8, 128], strides = [1, 1]} : vector<8x512xf32> to vector<8x128xf32>
    %30 = arith.mulf %21, %29 : vector<8x128xf32>
    %31 = arith.addf %28, %30 : vector<8x128xf32>
    %32 = math.tanh %31 : vector<8x128xf32>
    %cst_16 = arith.constant 1.000000e+00 : f32
    %33 = vector.broadcast %cst_16 : f32 to vector<8x128xf32>
    %34 = arith.subf %33, %27 : vector<8x128xf32>
    %35 = arith.mulf %34, %32 : vector<8x128xf32>
    %36 = arith.mulf %27, %4 : vector<8x128xf32>
    %37 = arith.addf %35, %36 : vector<8x128xf32>
    %38 = vector.broadcast %6 : vector<8x1xf32> to vector<8x128xf32>
    %39 = arith.mulf %38, %37 : vector<8x128xf32>
    %cst_17 = arith.constant 1.000000e+00 : f32
    %40 = vector.broadcast %cst_17 : f32 to vector<8x1xf32>
    %41 = arith.subf %40, %6 : vector<8x1xf32>
    %42 = vector.broadcast %41 : vector<8x1xf32> to vector<8x128xf32>
    %43 = arith.mulf %42, %4 : vector<8x128xf32>
    %44 = arith.addf %39, %43 : vector<8x128xf32>
    %cst_18 = arith.constant 1.000000e+00 : f32
    %45 = vector.broadcast %cst_18 : f32 to vector<8x1xf32>
    %46 = arith.subf %45, %8 : vector<8x1xf32>
    %47 = vector.broadcast %46 : vector<8x1xf32> to vector<8x128xf32>
    %48 = arith.mulf %47, %44 : vector<8x128xf32>
    %49 = arith.truncf %48 : vector<8x128xf32> to vector<8x128xbf16>
    %c0_19 = arith.constant 0 : index
    %c0_20 = arith.constant 0 : index
    %50 = vector.load %arg9[%c0_19, %c0_20] : memref<128x128xbf16, #tpu.memory_space<vmem>>, vector<128x128xbf16>
    %cst_21 = arith.constant dense<0.000000e+00> : vector<8x128xf32>
    %51 = tpu.matmul %49, %50, %cst_21 {dimension_numbers = #tpu.dot_dimension_numbers<[1], [0], [0], [1], [0, 0, 1, 1], [], []>} : vector<8x128xbf16>, vector<128x128xbf16>, vector<8x128xf32> -> vector<8x128xf32>
    %c0_22 = arith.constant 0 : index
    %c0_23 = arith.constant 0 : index
    %52 = vector.load %arg10[%c0_22, %c0_23] : memref<1x128xf32, #tpu.memory_space<vmem>>, vector<1x128xf32>
    %53 = vector.broadcast %52 : vector<1x128xf32> to vector<8x128xf32>
    %54 = arith.addf %51, %53 : vector<8x128xf32>
    %55 = math.tanh %54 : vector<8x128xf32>
    %56 = vector.broadcast %6 : vector<8x1xf32> to vector<8x128xf32>
    %57 = arith.mulf %56, %55 : vector<8x128xf32>
    %cst_24 = arith.constant 1.000000e+00 : f32
    %58 = vector.broadcast %cst_24 : f32 to vector<8x1xf32>
    %59 = arith.subf %58, %6 : vector<8x1xf32>
    %60 = vector.broadcast %59 : vector<8x1xf32> to vector<8x128xf32>
    %61 = arith.mulf %60, %3 : vector<8x128xf32>
    %62 = arith.addf %57, %61 : vector<8x128xf32>
    %cst_25 = arith.constant 1.000000e+00 : f32
    %63 = vector.broadcast %cst_25 : f32 to vector<8x1xf32>
    %64 = arith.subf %63, %8 : vector<8x1xf32>
    %65 = vector.broadcast %64 : vector<8x1xf32> to vector<8x128xf32>
    %66 = arith.mulf %65, %62 : vector<8x128xf32>
    %c8_i32 = arith.constant 8 : i32
    %67 = arith.muli %arg0, %c8_i32 : i32
    %c0_i32_26 = arith.constant 0 : i32
    %68 = arith.addi %67, %c0_i32_26 : i32
    %69 = arith.index_cast %arg1 : i32 to index
    %70 = arith.index_cast %68 : i32 to index
    %71 = memref.load %arg2[%69, %70] : memref<6x8xi32, #tpu.memory_space<smem>>
    %72 = arith.index_cast %71 : i32 to index
    %c0_27 = arith.constant 0 : index
    %73 = vector.load %arg11[%72, %c0_27] : memref<16x384xf32, #tpu.memory_space<vmem>>, vector<1x384xf32>
    %c0_28 = arith.constant 0 : index
    %c0_29 = arith.constant 0 : index
    %74 = vector.load %arg20[%c0_28, %c0_29] : memref<8x384xf32, #tpu.memory_space<vmem>>, vector<1x384xf32>
    tpu.vector_store %arg20[%c0_28, %c0_29], %73 {strides = array<i32>} : memref<8x384xf32, #tpu.memory_space<vmem>>, vector<1x384xf32>,
    %c8_i32_30 = arith.constant 8 : i32
    %75 = arith.muli %arg0, %c8_i32_30 : i32
    %c1_i32 = arith.constant 1 : i32
    %76 = arith.addi %75, %c1_i32 : i32
    %77 = arith.index_cast %arg1 : i32 to index
    %78 = arith.index_cast %76 : i32 to index
    %79 = memref.load %arg2[%77, %78] : memref<6x8xi32, #tpu.memory_space<smem>>
    %80 = arith.index_cast %79 : i32 to index
    %c0_31 = arith.constant 0 : index
    %81 = vector.load %arg11[%80, %c0_31] : memref<16x384xf32, #tpu.memory_space<vmem>>, vector<1x384xf32>
    %c1 = arith.constant 1 : index
    %c0_32 = arith.constant 0 : index
    %82 = vector.load %arg20[%c1, %c0_32] : memref<8x384xf32, #tpu.memory_space<vmem>>, vector<1x384xf32>
    tpu.vector_store %arg20[%c1, %c0_32], %81 {strides = array<i32>} : memref<8x384xf32, #tpu.memory_space<vmem>>, vector<1x384xf32>,
    %c8_i32_33 = arith.constant 8 : i32
    %83 = arith.muli %arg0, %c8_i32_33 : i32
    %c2_i32 = arith.constant 2 : i32
    %84 = arith.addi %83, %c2_i32 : i32
    %85 = arith.index_cast %arg1 : i32 to index
    %86 = arith.index_cast %84 : i32 to index
    %87 = memref.load %arg2[%85, %86] : memref<6x8xi32, #tpu.memory_space<smem>>
    %88 = arith.index_cast %87 : i32 to index
    %c0_34 = arith.constant 0 : index
    %89 = vector.load %arg11[%88, %c0_34] : memref<16x384xf32, #tpu.memory_space<vmem>>, vector<1x384xf32>
    %c2 = arith.constant 2 : index
    %c0_35 = arith.constant 0 : index
    %90 = vector.load %arg20[%c2, %c0_35] : memref<8x384xf32, #tpu.memory_space<vmem>>, vector<1x384xf32>
    tpu.vector_store %arg20[%c2, %c0_35], %89 {strides = array<i32>} : memref<8x384xf32, #tpu.memory_space<vmem>>, vector<1x384xf32>,
    %c8_i32_36 = arith.constant 8 : i32
    %91 = arith.muli %arg0, %c8_i32_36 : i32
    %c3_i32 = arith.constant 3 : i32
    %92 = arith.addi %91, %c3_i32 : i32
    %93 = arith.index_cast %arg1 : i32 to index
    %94 = arith.index_cast %92 : i32 to index
    %95 = memref.load %arg2[%93, %94] : memref<6x8xi32, #tpu.memory_space<smem>>
    %96 = arith.index_cast %95 : i32 to index
    %c0_37 = arith.constant 0 : index
    %97 = vector.load %arg11[%96, %c0_37] : memref<16x384xf32, #tpu.memory_space<vmem>>, vector<1x384xf32>
    %c3 = arith.constant 3 : index
    %c0_38 = arith.constant 0 : index
    %98 = vector.load %arg20[%c3, %c0_38] : memref<8x384xf32, #tpu.memory_space<vmem>>, vector<1x384xf32>
    tpu.vector_store %arg20[%c3, %c0_38], %97 {strides = array<i32>} : memref<8x384xf32, #tpu.memory_space<vmem>>, vector<1x384xf32>,
    %c8_i32_39 = arith.constant 8 : i32
    %99 = arith.muli %arg0, %c8_i32_39 : i32
    %c4_i32 = arith.constant 4 : i32
    %100 = arith.addi %99, %c4_i32 : i32
    %101 = arith.index_cast %arg1 : i32 to index
    %102 = arith.index_cast %100 : i32 to index
    %103 = memref.load %arg2[%101, %102] : memref<6x8xi32, #tpu.memory_space<smem>>
    %104 = arith.index_cast %103 : i32 to index
    %c0_40 = arith.constant 0 : index
    %105 = vector.load %arg11[%104, %c0_40] : memref<16x384xf32, #tpu.memory_space<vmem>>, vector<1x384xf32>
    %c4 = arith.constant 4 : index
    %c0_41 = arith.constant 0 : index
    %106 = vector.load %arg20[%c4, %c0_41] : memref<8x384xf32, #tpu.memory_space<vmem>>, vector<1x384xf32>
    tpu.vector_store %arg20[%c4, %c0_41], %105 {strides = array<i32>} : memref<8x384xf32, #tpu.memory_space<vmem>>, vector<1x384xf32>,
    %c8_i32_42 = arith.constant 8 : i32
    %107 = arith.muli %arg0, %c8_i32_42 : i32
    %c5_i32 = arith.constant 5 : i32
    %108 = arith.addi %107, %c5_i32 : i32
    %109 = arith.index_cast %arg1 : i32 to index
    %110 = arith.index_cast %108 : i32 to index
    %111 = memref.load %arg2[%109, %110] : memref<6x8xi32, #tpu.memory_space<smem>>
    %112 = arith.index_cast %111 : i32 to index
    %c0_43 = arith.constant 0 : index
    %113 = vector.load %arg11[%112, %c0_43] : memref<16x384xf32, #tpu.memory_space<vmem>>, vector<1x384xf32>
    %c5 = arith.constant 5 : index
    %c0_44 = arith.constant 0 : index
    %114 = vector.load %arg20[%c5, %c0_44] : memref<8x384xf32, #tpu.memory_space<vmem>>, vector<1x384xf32>
    tpu.vector_store %arg20[%c5, %c0_44], %113 {strides = array<i32>} : memref<8x384xf32, #tpu.memory_space<vmem>>, vector<1x384xf32>,
    %c8_i32_45 = arith.constant 8 : i32
    %115 = arith.muli %arg0, %c8_i32_45 : i32
    %c6_i32 = arith.constant 6 : i32
    %116 = arith.addi %115, %c6_i32 : i32
    %117 = arith.index_cast %arg1 : i32 to index
    %118 = arith.index_cast %116 : i32 to index
    %119 = memref.load %arg2[%117, %118] : memref<6x8xi32, #tpu.memory_space<smem>>
    %120 = arith.index_cast %119 : i32 to index
    %c0_46 = arith.constant 0 : index
    %121 = vector.load %arg11[%120, %c0_46] : memref<16x384xf32, #tpu.memory_space<vmem>>, vector<1x384xf32>
    %c6 = arith.constant 6 : index
    %c0_47 = arith.constant 0 : index
    %122 = vector.load %arg20[%c6, %c0_47] : memref<8x384xf32, #tpu.memory_space<vmem>>, vector<1x384xf32>
    tpu.vector_store %arg20[%c6, %c0_47], %121 {strides = array<i32>} : memref<8x384xf32, #tpu.memory_space<vmem>>, vector<1x384xf32>,
    %c8_i32_48 = arith.constant 8 : i32
    %123 = arith.muli %arg0, %c8_i32_48 : i32
    %c7_i32 = arith.constant 7 : i32
    %124 = arith.addi %123, %c7_i32 : i32
    %125 = arith.index_cast %arg1 : i32 to index
    %126 = arith.index_cast %124 : i32 to index
    %127 = memref.load %arg2[%125, %126] : memref<6x8xi32, #tpu.memory_space<smem>>
    %128 = arith.index_cast %127 : i32 to index
    %c0_49 = arith.constant 0 : index
    %129 = vector.load %arg11[%128, %c0_49] : memref<16x384xf32, #tpu.memory_space<vmem>>, vector<1x384xf32>
    %c7 = arith.constant 7 : index
    %c0_50 = arith.constant 0 : index
    %130 = vector.load %arg20[%c7, %c0_50] : memref<8x384xf32, #tpu.memory_space<vmem>>, vector<1x384xf32>
    tpu.vector_store %arg20[%c7, %c0_50], %129 {strides = array<i32>} : memref<8x384xf32, #tpu.memory_space<vmem>>, vector<1x384xf32>,
    %c0_51 = arith.constant 0 : index
    %c0_52 = arith.constant 0 : index
    %131 = vector.load %arg20[%c0_51, %c0_52] : memref<8x384xf32, #tpu.memory_space<vmem>>, vector<8x384xf32>
    %c0_53 = arith.constant 0 : index
    %c0_54 = arith.constant 0 : index
    %132 = vector.load %arg12[%c0_53, %c0_54] : memref<1x384xf32, #tpu.memory_space<vmem>>, vector<1x384xf32>
    %133 = vector.broadcast %132 : vector<1x384xf32> to vector<8x384xf32>
    %134 = arith.addf %131, %133 : vector<8x384xf32>
    %135 = arith.truncf %66 : vector<8x128xf32> to vector<8x128xbf16>
    %c0_55 = arith.constant 0 : index
    %c0_56 = arith.constant 0 : index
    %136 = vector.load %arg13[%c0_55, %c0_56] : memref<128x384xbf16, #tpu.memory_space<vmem>>, vector<128x384xbf16>
    %cst_57 = arith.constant dense<0.000000e+00> : vector<8x384xf32>
    %137 = tpu.matmul %135, %136, %cst_57 {dimension_numbers = #tpu.dot_dimension_numbers<[1], [0], [0], [1], [0, 0, 1, 1], [], []>} : vector<8x128xbf16>, vector<128x384xbf16>, vector<8x384xf32> -> vector<8x384xf32>
    %c0_58 = arith.constant 0 : index
    %c0_59 = arith.constant 0 : index
    %138 = vector.load %arg14[%c0_58, %c0_59] : memref<1x384xf32, #tpu.memory_space<vmem>>, vector<1x384xf32>
    %139 = vector.broadcast %138 : vector<1x384xf32> to vector<8x384xf32>
    %140 = arith.addf %137, %139 : vector<8x384xf32>
    %141 = vector.extract_strided_slice %134 {offsets = [0, 0], sizes = [8, 128], strides = [1, 1]} : vector<8x384xf32> to vector<8x128xf32>
    %142 = vector.extract_strided_slice %140 {offsets = [0, 0], sizes = [8, 128], strides = [1, 1]} : vector<8x384xf32> to vector<8x128xf32>
    %143 = arith.addf %141, %142 : vector<8x128xf32>
    %144 = arith.negf %143 : vector<8x128xf32>
    %145 = math.exp %144 : vector<8x128xf32>
    %cst_60 = arith.constant 1.000000e+00 : f32
    %146 = vector.broadcast %cst_60 : f32 to vector<8x128xf32>
    %147 = arith.addf %146, %145 : vector<8x128xf32>
    %148 = arith.divf %146, %147 : vector<8x128xf32>
    %149 = vector.extract_strided_slice %134 {offsets = [0, 128], sizes = [8, 128], strides = [1, 1]} : vector<8x384xf32> to vector<8x128xf32>
    %150 = vector.extract_strided_slice %140 {offsets = [0, 128], sizes = [8, 128], strides = [1, 1]} : vector<8x384xf32> to vector<8x128xf32>
    %151 = arith.addf %149, %150 : vector<8x128xf32>
    %152 = arith.negf %151 : vector<8x128xf32>
    %153 = math.exp %152 : vector<8x128xf32>
    %cst_61 = arith.constant 1.000000e+00 : f32
    %154 = vector.broadcast %cst_61 : f32 to vector<8x128xf32>
    %155 = arith.addf %154, %153 : vector<8x128xf32>
    %156 = arith.divf %154, %155 : vector<8x128xf32>
    %157 = vector.extract_strided_slice %134 {offsets = [0, 256], sizes = [8, 128], strides = [1, 1]} : vector<8x384xf32> to vector<8x128xf32>
    %158 = vector.extract_strided_slice %140 {offsets = [0, 256], sizes = [8, 128], strides = [1, 1]} : vector<8x384xf32> to vector<8x128xf32>
    %159 = arith.mulf %148, %158 : vector<8x128xf32>
    %160 = arith.addf %157, %159 : vector<8x128xf32>
    %161 = math.tanh %160 : vector<8x128xf32>
    %cst_62 = arith.constant 1.000000e+00 : f32
    %162 = vector.broadcast %cst_62 : f32 to vector<8x128xf32>
    %163 = arith.subf %162, %156 : vector<8x128xf32>
    %164 = arith.mulf %163, %161 : vector<8x128xf32>
    %165 = arith.mulf %156, %66 : vector<8x128xf32>
    %166 = arith.addf %164, %165 : vector<8x128xf32>
    %167 = arith.truncf %166 : vector<8x128xf32> to vector<8x128xbf16>
    %c0_63 = arith.constant 0 : index
    %c0_64 = arith.constant 0 : index
    %168 = vector.load %arg15[%c0_63, %c0_64] : memref<128x128xbf16, #tpu.memory_space<vmem>>, vector<128x128xbf16>
    %cst_65 = arith.constant dense<0.000000e+00> : vector<8x128xf32>
    %169 = tpu.matmul %167, %168, %cst_65 {dimension_numbers = #tpu.dot_dimension_numbers<[1], [0], [0], [1], [0, 0, 1, 1], [], []>} : vector<8x128xbf16>, vector<128x128xbf16>, vector<8x128xf32> -> vector<8x128xf32>
    %c0_66 = arith.constant 0 : index
    %c0_67 = arith.constant 0 : index
    %170 = vector.load %arg16[%c0_66, %c0_67] : memref<1x128xf32, #tpu.memory_space<vmem>>, vector<1x128xf32>
    %171 = vector.broadcast %170 : vector<1x128xf32> to vector<8x128xf32>
    %172 = arith.addf %169, %171 : vector<8x128xf32>
    %173 = math.tanh %172 : vector<8x128xf32>
    %c0_68 = arith.constant 0 : index
    %c0_69 = arith.constant 0 : index
    %c0_70 = arith.constant 0 : index
    %174 = vector.load %arg17[%c0_68, %c0_69, %c0_70] : memref<1x8x128xf32, #tpu.memory_space<vmem>>, vector<1x8x128xf32>
    %175 = vector.shape_cast %174 : vector<1x8x128xf32> to vector<8x128xf32>
    %176 = vector.shape_cast %173 : vector<8x128xf32> to vector<1x8x128xf32>
    tpu.vector_store %arg17[%c0_68, %c0_69, %c0_70], %176 {strides = array<i32>} : memref<1x8x128xf32, #tpu.memory_space<vmem>>, vector<1x8x128xf32>,
    %c0_71 = arith.constant 0 : index
    %c0_72 = arith.constant 0 : index
    %177 = vector.load %arg18[%c0_71, %c0_72] : memref<8x128xf32, #tpu.memory_space<vmem>>, vector<8x128xf32>
    tpu.vector_store %arg18[%c0_71, %c0_72], %166 {strides = array<i32>} : memref<8x128xf32, #tpu.memory_space<vmem>>, vector<8x128xf32>,
    %c0_73 = arith.constant 0 : index
    %c0_74 = arith.constant 0 : index
    %178 = vector.load %arg19[%c0_73, %c0_74] : memref<8x128xf32, #tpu.memory_space<vmem>>, vector<8x128xf32>
    tpu.vector_store %arg19[%c0_73, %c0_74], %48 {strides = array<i32>} : memref<8x128xf32, #tpu.memory_space<vmem>>, vector<8x128xf32>,
    return
  }
  func.func @transform_0(%arg0: i32, %arg1: i32, %arg2: memref<6x8xi32, #tpu.memory_space<smem>>) -> (i32, i32) {
    %c0_i32 = arith.constant 0 : i32
    %c0_i32_0 = arith.constant 0 : i32
    return %arg0, %c0_i32 : i32, i32
  }
  func.func @transform_1(%arg0: i32, %arg1: i32, %arg2: memref<6x8xi32, #tpu.memory_space<smem>>) -> (i32, i32) {
    %c0_i32 = arith.constant 0 : i32
    %c0_i32_0 = arith.constant 0 : i32
    return %arg0, %c0_i32 : i32, i32
  }
  func.func @transform_2(%arg0: i32, %arg1: i32, %arg2: memref<6x8xi32, #tpu.memory_space<smem>>) -> (i32, i32, i32) {
    %c0_i32 = arith.constant 0 : i32
    %c0_i32_0 = arith.constant 0 : i32
    return %arg1, %arg0, %c0_i32 : i32, i32, i32
  }
  func.func @transform_3(%arg0: i32, %arg1: i32, %arg2: memref<6x8xi32, #tpu.memory_space<smem>>) -> (i32, i32, i32) {
    %c0_i32 = arith.constant 0 : i32
    %c0_i32_0 = arith.constant 0 : i32
    return %arg1, %arg0, %c0_i32 : i32, i32, i32
  }
  func.func @transform_4(%arg0: i32, %arg1: i32, %arg2: memref<6x8xi32, #tpu.memory_space<smem>>) -> (i32, i32) {
    %c0_i32 = arith.constant 0 : i32
    %c0_i32_0 = arith.constant 0 : i32
    %c0_i32_1 = arith.constant 0 : i32
    return %c0_i32, %c0_i32_0 : i32, i32
  }
  func.func @transform_5(%arg0: i32, %arg1: i32, %arg2: memref<6x8xi32, #tpu.memory_space<smem>>) -> (i32, i32) {
    %c0_i32 = arith.constant 0 : i32
    %c0_i32_0 = arith.constant 0 : i32
    %c0_i32_1 = arith.constant 0 : i32
    return %c0_i32, %c0_i32_0 : i32, i32
  }
  func.func @transform_6(%arg0: i32, %arg1: i32, %arg2: memref<6x8xi32, #tpu.memory_space<smem>>) -> (i32, i32) {
    %c0_i32 = arith.constant 0 : i32
    %c0_i32_0 = arith.constant 0 : i32
    %c0_i32_1 = arith.constant 0 : i32
    return %c0_i32, %c0_i32_0 : i32, i32
  }
  func.func @transform_7(%arg0: i32, %arg1: i32, %arg2: memref<6x8xi32, #tpu.memory_space<smem>>) -> (i32, i32) {
    %c0_i32 = arith.constant 0 : i32
    %c0_i32_0 = arith.constant 0 : i32
    %c0_i32_1 = arith.constant 0 : i32
    return %c0_i32, %c0_i32_0 : i32, i32
  }
  func.func @transform_8(%arg0: i32, %arg1: i32, %arg2: memref<6x8xi32, #tpu.memory_space<smem>>) -> (i32, i32) {
    %c0_i32 = arith.constant 0 : i32
    %c0_i32_0 = arith.constant 0 : i32
    %c0_i32_1 = arith.constant 0 : i32
    return %c0_i32, %c0_i32_0 : i32, i32
  }
  func.func @transform_9(%arg0: i32, %arg1: i32, %arg2: memref<6x8xi32, #tpu.memory_space<smem>>) -> (i32, i32) {
    %c0_i32 = arith.constant 0 : i32
    %c0_i32_0 = arith.constant 0 : i32
    %c0_i32_1 = arith.constant 0 : i32
    return %c0_i32, %c0_i32_0 : i32, i32
  }
  func.func @transform_10(%arg0: i32, %arg1: i32, %arg2: memref<6x8xi32, #tpu.memory_space<smem>>) -> (i32, i32) {
    %c0_i32 = arith.constant 0 : i32
    %c0_i32_0 = arith.constant 0 : i32
    %c0_i32_1 = arith.constant 0 : i32
    return %c0_i32, %c0_i32_0 : i32, i32
  }
  func.func @transform_11(%arg0: i32, %arg1: i32, %arg2: memref<6x8xi32, #tpu.memory_space<smem>>) -> (i32, i32) {
    %c0_i32 = arith.constant 0 : i32
    %c0_i32_0 = arith.constant 0 : i32
    %c0_i32_1 = arith.constant 0 : i32
    return %c0_i32, %c0_i32_0 : i32, i32
  }
  func.func @transform_12(%arg0: i32, %arg1: i32, %arg2: memref<6x8xi32, #tpu.memory_space<smem>>) -> (i32, i32) {
    %c0_i32 = arith.constant 0 : i32
    %c0_i32_0 = arith.constant 0 : i32
    %c0_i32_1 = arith.constant 0 : i32
    return %c0_i32, %c0_i32_0 : i32, i32
  }
  func.func @transform_13(%arg0: i32, %arg1: i32, %arg2: memref<6x8xi32, #tpu.memory_space<smem>>) -> (i32, i32) {
    %c0_i32 = arith.constant 0 : i32
    %c0_i32_0 = arith.constant 0 : i32
    %c0_i32_1 = arith.constant 0 : i32
    return %c0_i32, %c0_i32_0 : i32, i32
  }
  func.func @transform_14(%arg0: i32, %arg1: i32, %arg2: memref<6x8xi32, #tpu.memory_space<smem>>) -> (i32, i32, i32) {
    %c0_i32 = arith.constant 0 : i32
    %c0_i32_0 = arith.constant 0 : i32
    return %arg1, %arg0, %c0_i32 : i32, i32, i32
  }
  func.func @transform_15(%arg0: i32, %arg1: i32, %arg2: memref<6x8xi32, #tpu.memory_space<smem>>) -> (i32, i32) {
    %c0_i32 = arith.constant 0 : i32
    %c0_i32_0 = arith.constant 0 : i32
    return %arg0, %c0_i32 : i32, i32
  }
  func.func @transform_16(%arg0: i32, %arg1: i32, %arg2: memref<6x8xi32, #tpu.memory_space<smem>>) -> (i32, i32) {
    %c0_i32 = arith.constant 0 : i32
    %c0_i32_0 = arith.constant 0 : i32
    return %arg0, %c0_i32 : i32, i32
  }
}

</mosaic_0001>

<llo_original>
// kernel: tpu_custom_call.1
$region0: #{tpu_custom_call.1}
  #allocation0 [shape = 'u32[]', space=smem, size = 0x4, offset = 0x4, fixed_abs, tag = 'smem constant byte address 0x4 - core index']
  #allocation1 [shape = 'u32[144,128]{1,0:T(1,128)}', space=vmem, size = 0x12000, scoped, tag = 'internal scratch']
  #allocation2 [shape = 'f32[8,384]{1,0:T(8,128)}', space=vmem, size = 0x3000, scoped, tag = 'scratch operand']
  #allocation3 [shape = 's32[1]{0}', space=sflag, size = 0x4, scoped, tag = 'scoped memory for tpu_custom_call.1']
  #allocation4 [shape = 'u8[4096]{0}', space=smem, size = 0x1000, scoped, tag = 'prefetched SMEM operand 0']
  %s0 = inlined_call_operand.hbm [shape: s32[6,8], index: 0, kind: input, shape index: {}]
  %s1 = inlined_call_operand.hbm [shape: f32[8,128], index: 1, kind: input, shape index: {}]
  %s2 = inlined_call_operand.hbm [shape: f32[8,128], index: 2, kind: input, shape index: {}]
  %s3 = inlined_call_operand.vmem [shape: f32[6,8,1], index: 3, kind: input, shape index: {}]
  %s4 = inlined_call_operand.vmem [shape: f32[6,8,1], index: 4, kind: input, shape index: {}]
  %s5 = inlined_call_operand.hbm [shape: bf16[256,512], index: 5, kind: input, shape index: {}]
  %s6 = inlined_call_operand.hbm [shape: f32[1,512], index: 6, kind: input, shape index: {}]
  %s7 = inlined_call_operand.vmem [shape: bf16[128,128], index: 7, kind: input, shape index: {}]
  %s8 = inlined_call_operand.vmem [shape: f32[1,128], index: 8, kind: input, shape index: {}]
  %s9 = inlined_call_operand.hbm [shape: f32[16,384], index: 9, kind: input, shape index: {}]
  %s10 = inlined_call_operand.vmem [shape: f32[1,384], index: 10, kind: input, shape index: {}]
  %s11 = inlined_call_operand.hbm [shape: bf16[128,384], index: 11, kind: input, shape index: {}]
  %s12 = inlined_call_operand.vmem [shape: f32[1,384], index: 12, kind: input, shape index: {}]
  %s13 = inlined_call_operand.vmem [shape: bf16[128,128], index: 13, kind: input, shape index: {}]
  %s14 = inlined_call_operand.vmem [shape: f32[1,128], index: 14, kind: input, shape index: {}]
  %s15 = inlined_call_operand.hbm [shape: f32[6,8,128], index: 15, kind: output, shape index: {0}]
  %s16 = inlined_call_operand.hbm [shape: f32[8,128], index: 16, kind: output, shape index: {1}]
  %s17 = inlined_call_operand.hbm [shape: f32[8,128], index: 17, kind: output, shape index: {2}]
  %18 = xla_tuple %s15, %s16, %s17
  %s19 = sld [smem:[#allocation0]]
  $region133: #{tpu_custom_call.1} parent=0
    _
  %s21 = ssub.s32 1, %s19
  %s22 = scalar_select 0, %s21, %s19
  %24 = dma.hbm_to_smem %s0, 128, [#allocation4], [#allocation3]
  %25 = dma.done [#allocation3], 128
  %26 = sfence
  $region1: #{tpu_custom_call.1} parent=0
    #allocation5 [shape = 'u8[4096]{0}', space=vmem, size = 0x1000, scoped, tag = 'input window, operand 1, single buffered']
    #allocation6 [shape = 's32[2]{0}', space=sflag, size = 0x8, scoped, tag = 'scoped memory for tpu_custom_call.1']
    #allocation7 [shape = 's32[2]{0}', space=sflag, size = 0x8, scoped, tag = 'scoped memory for tpu_custom_call.1']
    #allocation8 [shape = 'u8[4096]{0}', space=vmem, size = 0x1000, scoped, tag = 'input window, operand 2, single buffered']
    #allocation9 [shape = 's32[1]{0}', space=sflag, size = 0x4, scoped, tag = 'scoped memory for tpu_custom_call.1']
    #allocation10 [shape = 'u8[262144]{0}', space=vmem, size = 0x40000, scoped, tag = 'input window, operand 5, single buffered']
    #allocation11 [shape = 'u8[2048]{0}', space=vmem, size = 0x800, scoped, tag = 'input window, operand 6, single buffered']
    #allocation12 [shape = 's32[1]{0}', space=sflag, size = 0x4, scoped, tag = 'scoped memory for tpu_custom_call.1']
    #allocation13 [shape = 'u8[24576]{0}', space=vmem, size = 0x6000, scoped, tag = 'input window, operand 9, single buffered']
    #allocation14 [shape = 'u8[98304]{0}', space=vmem, size = 0x18000, scoped, tag = 'input window, operand 11, single buffered']
    #allocation15 [shape = 's32[1]{0}', space=sflag, size = 0x4, scoped, tag = 'scoped memory for tpu_custom_call.1']
    #allocation16 [shape = 'u8[8192]{0}', space=vmem, size = 0x2000, scoped, tag = 'output window, operand 0']
    #allocation17 [shape = 'u8[4096]{0}', space=vmem, size = 0x1000, scoped, tag = 'output window, operand 1, single buffered']
    #allocation18 [shape = 's32[1]{0}', space=sflag, size = 0x4, scoped, tag = 'scoped memory for tpu_custom_call.1']
    #allocation19 [shape = 'u8[4096]{0}', space=vmem, size = 0x1000, scoped, tag = 'output window, operand 2, single buffered']
    %27 = vsyncpa [#allocation6], 0
    %28 = vsyncpa [#allocation9], 0
    %29 = vsyncpa [#allocation12], 0
    %30 = vsyncpa [#allocation15], 0
    %31 = vsyncpa [#allocation7], 0
    %s32 = scalar_lea.sflag [#allocation7], 1
    %33 = vsyncpa %s32, 0
    %34 = vsyncpa [#allocation18], 0
    loop: start=0, step=1, limit=8
    $region2: #{tpu_custom_call.1} parent=1 // loop_pre_header
      _
    $region3: #{tpu_custom_call.1} parent=1 // loop_header
      %s36 = sphi 0, %s40
      %p37 = scmp.ge.s32.totalorder %s36, 8
      %s43 = sphi 0, %s55
      %s44 = sphi 0, %s51
      %s45 = sphi 0, %s43
      %s46 = sphi 0, %s44
      %s47 = sphi 0, %s45
      %s48 = sphi 0, %s46
      %s58 = sphi 0, %s60
      %s61 = sphi 0, %s58
      %s62 = sphi 0, %s61
      %s78 = sphi 0, %s62
      %s84 = sphi 0, %s86
      %s87 = sphi 0, %s84
      %s88 = sphi 0, %s87
      %s104 = sphi 0, %s88
      %s112 = sphi 0, %s114
      %s115 = sphi 0, %s112
      %s116 = sphi 0, %s115
      %s132 = sphi 0, %s116
      %s140 = sphi 0, %s142
      %s143 = sphi 0, %s140
      %s144 = sphi 0, %s143
      %s160 = sphi 0, %s144
      %s164 = sphi 0, %s164
      %s166 = sphi 0, %s164
      %s167 = sphi 0, %s166
      %s181 = sphi 0, %s167
      %s185 = sphi 0, %s185
      %s187 = sphi 0, %s185
      %s188 = sphi 0, %s187
      %s202 = sphi 0, %s188
      %s206 = sphi 0, %s206
      %s208 = sphi 0, %s206
      %s209 = sphi 0, %s208
      %s223 = sphi 0, %s209
      %s227 = sphi 0, %s227
      %s229 = sphi 0, %s227
      %s230 = sphi 0, %s229
      %s244 = sphi 0, %s230
      %s248 = sphi 0, %s248
      %s250 = sphi 0, %s248
      %s251 = sphi 0, %s250
      %s265 = sphi 0, %s251
      %s269 = sphi 0, %s269
      %s271 = sphi 0, %s269
      %s272 = sphi 0, %s271
      %s286 = sphi 0, %s272
      %s290 = sphi 0, %s290
      %s292 = sphi 0, %s290
      %s293 = sphi 0, %s292
      %s307 = sphi 0, %s293
      %s311 = sphi 0, %s311
      %s313 = sphi 0, %s311
      %s314 = sphi 0, %s313
      %s328 = sphi 0, %s314
      %s332 = sphi 0, %s332
      %s334 = sphi 0, %s332
      %s335 = sphi 0, %s334
      %s349 = sphi 0, %s335
      %s353 = sphi 0, %s353
      %s355 = sphi 0, %s353
      %s356 = sphi 0, %s355
      %s370 = sphi 0, %s356
      %s378 = sphi 0, %s380
      %s381 = sphi 0, %s378
      %s382 = sphi 0, %s381
      %s398 = sphi 0, %s382
      %s404 = sphi 0, %s406
      %s407 = sphi 0, %s404
      %s408 = sphi 0, %s407
      %s424 = sphi 0, %s408
      %s430 = sphi 0, %s432
      %s433 = sphi 0, %s430
      %s434 = sphi 0, %s433
      %s450 = sphi 0, %s434
    $region4: #{tpu_custom_call.1} parent=1 // loop_header_branch
      %39 = sbr.rel (%p37) target = $region8
    $region5: #{tpu_custom_call.1} parent=1 // loop_body
      %s41 = ssub.s32 %s36, 1
      %s42 = ssub.s32 %s36, 2
      %s49 = sadd.s32 1, %s44
      %p50 = scmp.ge.s32.totalorder %s49, 6
      %s51 = scalar_select %p50, 0, %s49
      %s52 = sadd.s32 1, %s43
      %s53 = scalar_select %p50, %s52, %s43
      %p54 = scmp.ge.s32.totalorder %s53, 1
      %s55 = scalar_select %p54, 0, %s53
      %s56 = ssub.s32 %s43, %s55
      %p57 = scmp.eq.s32.totalorder %s56, 0
      %s59 = sadd.s32 %s58, 1
      %s60 = scalar_select %p57, %s58, %s59
      %p63 = pneg %p57
      %p64 = scmp.eq.s32.totalorder %s36, 5
      %p65 = por %p63, %p64
      %p66 = scmp.ne.s32.totalorder %s58, %s61
      %p67 = scmp.eq.s32.totalorder %s36, 0
      %p68 = por %p66, %p67
      %p69 = scmp.ne.s32.totalorder %s58, %s61
      %p70 = scmp.eq.s32.totalorder %s41, 5
      %p71 = por %p69, %p70
      %p72 = scmp.ne.s32.totalorder %s61, %s62
      %p73 = scmp.eq.s32.totalorder %s41, 0
      %p74 = por %p72, %p73
      %p75 = scmp.ne.s32.totalorder %s61, %s62
      %p76 = scmp.eq.s32.totalorder %s42, 5
      %p77 = por %p75, %p76
      %p79 = scmp.ne.s32.totalorder %s62, %s78
      %p80 = scmp.eq.s32.totalorder %s42, 0
      %p81 = por %p79, %p80
      %s82 = ssub.s32 %s43, %s55
      %p83 = scmp.eq.s32.totalorder %s82, 0
      %s85 = sadd.s32 %s84, 1
      %s86 = scalar_select %p83, %s84, %s85
      %p89 = pneg %p83
      %p90 = scmp.eq.s32.totalorder %s36, 5
      %p91 = por %p89, %p90
      %p92 = scmp.ne.s32.totalorder %s84, %s87
      %p93 = scmp.eq.s32.totalorder %s36, 0
      %p94 = por %p92, %p93
      %p95 = scmp.ne.s32.totalorder %s84, %s87
      %p96 = scmp.eq.s32.totalorder %s41, 5
      %p97 = por %p95, %p96
      %p98 = scmp.ne.s32.totalorder %s87, %s88
      %p99 = scmp.eq.s32.totalorder %s41, 0
      %p100 = por %p98, %p99
      %p101 = scmp.ne.s32.totalorder %s87, %s88
      %p102 = scmp.eq.s32.totalorder %s42, 5
      %p103 = por %p101, %p102
      %p105 = scmp.ne.s32.totalorder %s88, %s104
      %p106 = scmp.eq.s32.totalorder %s42, 0
      %p107 = por %p105, %p106
      %s108 = ssub.s32 %s44, %s51
      %s109 = ssub.s32 %s43, %s55
      %s110 = sor.u32 %s108, %s109
      %p111 = scmp.eq.s32.totalorder %s110, 0
      %s113 = sadd.s32 %s112, 1
      %s114 = scalar_select %p111, %s112, %s113
      %p117 = pneg %p111
      %p118 = scmp.eq.s32.totalorder %s36, 5
      %p119 = por %p117, %p118
      %p120 = scmp.ne.s32.totalorder %s112, %s115
      %p121 = scmp.eq.s32.totalorder %s36, 0
      %p122 = por %p120, %p121
      %p123 = scmp.ne.s32.totalorder %s112, %s115
      %p124 = scmp.eq.s32.totalorder %s41, 5
      %p125 = por %p123, %p124
      %p126 = scmp.ne.s32.totalorder %s115, %s116
      %p127 = scmp.eq.s32.totalorder %s41, 0
      %p128 = por %p126, %p127
      %p129 = scmp.ne.s32.totalorder %s115, %s116
      %p130 = scmp.eq.s32.totalorder %s42, 5
      %p131 = por %p129, %p130
      %p133 = scmp.ne.s32.totalorder %s116, %s132
      %p134 = scmp.eq.s32.totalorder %s42, 0
      %p135 = por %p133, %p134
      %s136 = ssub.s32 %s44, %s51
      %s137 = ssub.s32 %s43, %s55
      %s138 = sor.u32 %s136, %s137
      %p139 = scmp.eq.s32.totalorder %s138, 0
      %s141 = sadd.s32 %s140, 1
      %s142 = scalar_select %p139, %s140, %s141
      %p145 = pneg %p139
      %p146 = scmp.eq.s32.totalorder %s36, 5
      %p147 = por %p145, %p146
      %p148 = scmp.ne.s32.totalorder %s140, %s143
      %p149 = scmp.eq.s32.totalorder %s36, 0
      %p150 = por %p148, %p149
      %p151 = scmp.ne.s32.totalorder %s140, %s143
      %p152 = scmp.eq.s32.totalorder %s41, 5
      %p153 = por %p151, %p152
      %p154 = scmp.ne.s32.totalorder %s143, %s144
      %p155 = scmp.eq.s32.totalorder %s41, 0
      %p156 = por %p154, %p155
      %p157 = scmp.ne.s32.totalorder %s143, %s144
      %p158 = scmp.eq.s32.totalorder %s42, 5
      %p159 = por %p157, %p158
      %p161 = scmp.ne.s32.totalorder %s144, %s160
      %p162 = scmp.eq.s32.totalorder %s42, 0
      %p163 = por %p161, %p162
      %s165 = sadd.s32 %s164, 1
      %p168 = scmp.eq.s32.totalorder %s36, 5
      %p169 = scmp.ne.s32.totalorder %s164, %s166
      %p170 = scmp.eq.s32.totalorder %s36, 0
      %p171 = por %p169, %p170
      %p172 = scmp.ne.s32.totalorder %s164, %s166
      %p173 = scmp.eq.s32.totalorder %s41, 5
      %p174 = por %p172, %p173
      %p175 = scmp.ne.s32.totalorder %s166, %s167
      %p176 = scmp.eq.s32.totalorder %s41, 0
      %p177 = por %p175, %p176
      %p178 = scmp.ne.s32.totalorder %s166, %s167
      %p179 = scmp.eq.s32.totalorder %s42, 5
      %p180 = por %p178, %p179
      %p182 = scmp.ne.s32.totalorder %s167, %s181
      %p183 = scmp.eq.s32.totalorder %s42, 0
      %p184 = por %p182, %p183
      %s186 = sadd.s32 %s185, 1
      %p189 = scmp.eq.s32.totalorder %s36, 5
      %p190 = scmp.ne.s32.totalorder %s185, %s187
      %p191 = scmp.eq.s32.totalorder %s36, 0
      %p192 = por %p190, %p191
      %p193 = scmp.ne.s32.totalorder %s185, %s187
      %p194 = scmp.eq.s32.totalorder %s41, 5
      %p195 = por %p193, %p194
      %p196 = scmp.ne.s32.totalorder %s187, %s188
      %p197 = scmp.eq.s32.totalorder %s41, 0
      %p198 = por %p196, %p197
      %p199 = scmp.ne.s32.totalorder %s187, %s188
      %p200 = scmp.eq.s32.totalorder %s42, 5
      %p201 = por %p199, %p200
      %p203 = scmp.ne.s32.totalorder %s188, %s202
      %p204 = scmp.eq.s32.totalorder %s42, 0
      %p205 = por %p203, %p204
      %s207 = sadd.s32 %s206, 1
      %p210 = scmp.eq.s32.totalorder %s36, 5
      %p211 = scmp.ne.s32.totalorder %s206, %s208
      %p212 = scmp.eq.s32.totalorder %s36, 0
      %p213 = por %p211, %p212
      %p214 = scmp.ne.s32.totalorder %s206, %s208
      %p215 = scmp.eq.s32.totalorder %s41, 5
      %p216 = por %p214, %p215
      %p217 = scmp.ne.s32.totalorder %s208, %s209
      %p218 = scmp.eq.s32.totalorder %s41, 0
      %p219 = por %p217, %p218
      %p220 = scmp.ne.s32.totalorder %s208, %s209
      %p221 = scmp.eq.s32.totalorder %s42, 5
      %p222 = por %p220, %p221
      %p224 = scmp.ne.s32.totalorder %s209, %s223
      %p225 = scmp.eq.s32.totalorder %s42, 0
      %p226 = por %p224, %p225
      %s228 = sadd.s32 %s227, 1
      %p231 = scmp.eq.s32.totalorder %s36, 5
      %p232 = scmp.ne.s32.totalorder %s227, %s229
      %p233 = scmp.eq.s32.totalorder %s36, 0
      %p234 = por %p232, %p233
      %p235 = scmp.ne.s32.totalorder %s227, %s229
      %p236 = scmp.eq.s32.totalorder %s41, 5
      %p237 = por %p235, %p236
      %p238 = scmp.ne.s32.totalorder %s229, %s230
      %p239 = scmp.eq.s32.totalorder %s41, 0
      %p240 = por %p238, %p239
      %p241 = scmp.ne.s32.totalorder %s229, %s230
      %p242 = scmp.eq.s32.totalorder %s42, 5
      %p243 = por %p241, %p242
      %p245 = scmp.ne.s32.totalorder %s230, %s244
      %p246 = scmp.eq.s32.totalorder %s42, 0
      %p247 = por %p245, %p246
      %s249 = sadd.s32 %s248, 1
      %p252 = scmp.eq.s32.totalorder %s36, 5
      %p253 = scmp.ne.s32.totalorder %s248, %s250
      %p254 = scmp.eq.s32.totalorder %s36, 0
      %p255 = por %p253, %p254
      %p256 = scmp.ne.s32.totalorder %s248, %s250
      %p257 = scmp.eq.s32.totalorder %s41, 5
      %p258 = por %p256, %p257
      %p259 = scmp.ne.s32.totalorder %s250, %s251
      %p260 = scmp.eq.s32.totalorder %s41, 0
      %p261 = por %p259, %p260
      %p262 = scmp.ne.s32.totalorder %s250, %s251
      %p263 = scmp.eq.s32.totalorder %s42, 5
      %p264 = por %p262, %p263
      %p266 = scmp.ne.s32.totalorder %s251, %s265
      %p267 = scmp.eq.s32.totalorder %s42, 0
      %p268 = por %p266, %p267
      %s270 = sadd.s32 %s269, 1
      %p273 = scmp.eq.s32.totalorder %s36, 5
      %p274 = scmp.ne.s32.totalorder %s269, %s271
      %p275 = scmp.eq.s32.totalorder %s36, 0
      %p276 = por %p274, %p275
      %p277 = scmp.ne.s32.totalorder %s269, %s271
      %p278 = scmp.eq.s32.totalorder %s41, 5
      %p279 = por %p277, %p278
      %p280 = scmp.ne.s32.totalorder %s271, %s272
      %p281 = scmp.eq.s32.totalorder %s41, 0
      %p282 = por %p280, %p281
      %p283 = scmp.ne.s32.totalorder %s271, %s272
      %p284 = scmp.eq.s32.totalorder %s42, 5
      %p285 = por %p283, %p284
      %p287 = scmp.ne.s32.totalorder %s272, %s286
      %p288 = scmp.eq.s32.totalorder %s42, 0
      %p289 = por %p287, %p288
      %s291 = sadd.s32 %s290, 1
      %p294 = scmp.eq.s32.totalorder %s36, 5
      %p295 = scmp.ne.s32.totalorder %s290, %s292
      %p296 = scmp.eq.s32.totalorder %s36, 0
      %p297 = por %p295, %p296
      %p298 = scmp.ne.s32.totalorder %s290, %s292
      %p299 = scmp.eq.s32.totalorder %s41, 5
      %p300 = por %p298, %p299
      %p301 = scmp.ne.s32.totalorder %s292, %s293
      %p302 = scmp.eq.s32.totalorder %s41, 0
      %p303 = por %p301, %p302
      %p304 = scmp.ne.s32.totalorder %s292, %s293
      %p305 = scmp.eq.s32.totalorder %s42, 5
      %p306 = por %p304, %p305
      %p308 = scmp.ne.s32.totalorder %s293, %s307
      %p309 = scmp.eq.s32.totalorder %s42, 0
      %p310 = por %p308, %p309
      %s312 = sadd.s32 %s311, 1
      %p315 = scmp.eq.s32.totalorder %s36, 5
      %p316 = scmp.ne.s32.totalorder %s311, %s313
      %p317 = scmp.eq.s32.totalorder %s36, 0
      %p318 = por %p316, %p317
      %p319 = scmp.ne.s32.totalorder %s311, %s313
      %p320 = scmp.eq.s32.totalorder %s41, 5
      %p321 = por %p319, %p320
      %p322 = scmp.ne.s32.totalorder %s313, %s314
      %p323 = scmp.eq.s32.totalorder %s41, 0
      %p324 = por %p322, %p323
      %p325 = scmp.ne.s32.totalorder %s313, %s314
      %p326 = scmp.eq.s32.totalorder %s42, 5
      %p327 = por %p325, %p326
      %p329 = scmp.ne.s32.totalorder %s314, %s328
      %p330 = scmp.eq.s32.totalorder %s42, 0
      %p331 = por %p329, %p330
      %s333 = sadd.s32 %s332, 1
      %p336 = scmp.eq.s32.totalorder %s36, 5
      %p337 = scmp.ne.s32.totalorder %s332, %s334
      %p338 = scmp.eq.s32.totalorder %s36, 0
      %p339 = por %p337, %p338
      %p340 = scmp.ne.s32.totalorder %s332, %s334
      %p341 = scmp.eq.s32.totalorder %s41, 5
      %p342 = por %p340, %p341
      %p343 = scmp.ne.s32.totalorder %s334, %s335
      %p344 = scmp.eq.s32.totalorder %s41, 0
      %p345 = por %p343, %p344
      %p346 = scmp.ne.s32.totalorder %s334, %s335
      %p347 = scmp.eq.s32.totalorder %s42, 5
      %p348 = por %p346, %p347
      %p350 = scmp.ne.s32.totalorder %s335, %s349
      %p351 = scmp.eq.s32.totalorder %s42, 0
      %p352 = por %p350, %p351
      %s354 = sadd.s32 %s353, 1
      %p357 = scmp.eq.s32.totalorder %s36, 5
      %p358 = scmp.ne.s32.totalorder %s353, %s355
      %p359 = scmp.eq.s32.totalorder %s36, 0
      %p360 = por %p358, %p359
      %p361 = scmp.ne.s32.totalorder %s353, %s355
      %p362 = scmp.eq.s32.totalorder %s41, 5
      %p363 = por %p361, %p362
      %p364 = scmp.ne.s32.totalorder %s355, %s356
      %p365 = scmp.eq.s32.totalorder %s41, 0
      %p366 = por %p364, %p365
      %p367 = scmp.ne.s32.totalorder %s355, %s356
      %p368 = scmp.eq.s32.totalorder %s42, 5
      %p369 = por %p367, %p368
      %p371 = scmp.ne.s32.totalorder %s356, %s370
      %p372 = scmp.eq.s32.totalorder %s42, 0
      %p373 = por %p371, %p372
      %s374 = ssub.s32 %s44, %s51
      %s375 = ssub.s32 %s43, %s55
      %s376 = sor.u32 %s374, %s375
      %p377 = scmp.eq.s32.totalorder %s376, 0
      %s379 = sadd.s32 %s378, 1
      %s380 = scalar_select %p377, %s378, %s379
      %p383 = pneg %p377
      %p384 = scmp.eq.s32.totalorder %s36, 5
      %p385 = por %p383, %p384
      %p386 = scmp.ne.s32.totalorder %s378, %s381
      %p387 = scmp.eq.s32.totalorder %s36, 0
      %p388 = por %p386, %p387
      %p389 = scmp.ne.s32.totalorder %s378, %s381
      %p390 = scmp.eq.s32.totalorder %s41, 5
      %p391 = por %p389, %p390
      %p392 = scmp.ne.s32.totalorder %s381, %s382
      %p393 = scmp.eq.s32.totalorder %s41, 0
      %p394 = por %p392, %p393
      %p395 = scmp.ne.s32.totalorder %s381, %s382
      %p396 = scmp.eq.s32.totalorder %s42, 5
      %p397 = por %p395, %p396
      %p399 = scmp.ne.s32.totalorder %s382, %s398
      %p400 = scmp.eq.s32.totalorder %s42, 0
      %p401 = por %p399, %p400
      %s402 = ssub.s32 %s43, %s55
      %p403 = scmp.eq.s32.totalorder %s402, 0
      %s405 = sadd.s32 %s404, 1
      %s406 = scalar_select %p403, %s404, %s405
      %p409 = pneg %p403
      %p410 = scmp.eq.s32.totalorder %s36, 5
      %p411 = por %p409, %p410
      %p412 = scmp.ne.s32.totalorder %s404, %s407
      %p413 = scmp.eq.s32.totalorder %s36, 0
      %p414 = por %p412, %p413
      %p415 = scmp.ne.s32.totalorder %s404, %s407
      %p416 = scmp.eq.s32.totalorder %s41, 5
      %p417 = por %p415, %p416
      %p418 = scmp.ne.s32.totalorder %s407, %s408
      %p419 = scmp.eq.s32.totalorder %s41, 0
      %p420 = por %p418, %p419
      %p421 = scmp.ne.s32.totalorder %s407, %s408
      %p422 = scmp.eq.s32.totalorder %s42, 5
      %p423 = por %p421, %p422
      %p425 = scmp.ne.s32.totalorder %s408, %s424
      %p426 = scmp.eq.s32.totalorder %s42, 0
      %p427 = por %p425, %p426
      %s428 = ssub.s32 %s43, %s55
      %p429 = scmp.eq.s32.totalorder %s428, 0
      %s431 = sadd.s32 %s430, 1
      %s432 = scalar_select %p429, %s430, %s431
      %p435 = pneg %p429
      %p436 = scmp.eq.s32.totalorder %s36, 5
      %p437 = por %p435, %p436
      %p438 = scmp.ne.s32.totalorder %s430, %s433
      %p439 = scmp.eq.s32.totalorder %s36, 0
      %p440 = por %p438, %p439
      %p441 = scmp.ne.s32.totalorder %s430, %s433
      %p442 = scmp.eq.s32.totalorder %s41, 5
      %p443 = por %p441, %p442
      %p444 = scmp.ne.s32.totalorder %s433, %s434
      %p445 = scmp.eq.s32.totalorder %s41, 0
      %p446 = por %p444, %p445
      %p447 = scmp.ne.s32.totalorder %s433, %s434
      %p448 = scmp.eq.s32.totalorder %s42, 5
      %p449 = por %p447, %p448
      %p451 = scmp.ne.s32.totalorder %s434, %s450
      %p452 = scmp.eq.s32.totalorder %s42, 0
      %p453 = por %p451, %p452
      %p454 = scmp.le.s32.totalorder 1, %s36
      %p455 = scmp.lt.s32.totalorder %s36, 7
      %p456 = pnand %p454, %p455
      %p457 = pneg %p456
      // Predicated region
      $region9: #{tpu_custom_call.1} parent=5 // pred_check
        _
      $region10: #{tpu_custom_call.1} parent=5 // pred_check_branch
        %459 = sbr.rel (%p456) target = $region12
      $region11: #{tpu_custom_call.1} parent=5 // pred_region
        %s460 = ssub.s32 %s36, 1
        // Predicated region
        $region13: #{tpu_custom_call.1} parent=11 // pred_check
          %p461 = pneg %p74
        $region14: #{tpu_custom_call.1} parent=11 // pred_check_branch
          %463 = sbr.rel (%p461) target = $region16
        $region15: #{tpu_custom_call.1} parent=11 // pred_region
          %s465 = ssub.s32 128, 128
          %466 = vsyncadd [#allocation6], %s465
          %s467 = smul.addr %s45, 128
          %s468 = scalar_lea.hbm %s1, %s467
          %s470 = sshll.u32 [#allocation5], 4
          %s471 = int_to_ptr.vmem [resolvable:$true] %s470
          %473 = dma.hbm_to_vmem [thread:$0]  %s468, 128, %s471, [#allocation6]
        $region16: #{tpu_custom_call.1} parent=11 // pred_fallthru
          _
        // Predicated region
        $region17: #{tpu_custom_call.1} parent=11 // pred_check
          %p474 = pneg %p100
        $region18: #{tpu_custom_call.1} parent=11 // pred_check_branch
          %476 = sbr.rel (%p474) target = $region20
        $region19: #{tpu_custom_call.1} parent=11 // pred_region
          %s478 = ssub.s32 128, 128
          %479 = vsyncadd [#allocation9], %s478
          %s480 = smul.addr %s45, 128
          %s481 = scalar_lea.hbm %s2, %s480
          %s483 = sshll.u32 [#allocation8], 4
          %s484 = int_to_ptr.vmem [resolvable:$true] %s483
          %486 = dma.hbm_to_vmem [thread:$0]  %s481, 128, %s484, [#allocation9]
        $region20: #{tpu_custom_call.1} parent=11 // pred_fallthru
          _
        // Predicated region
        $region21: #{tpu_custom_call.1} parent=11 // pred_check
          %p487 = pneg %p177
        $region22: #{tpu_custom_call.1} parent=11 // pred_check_branch
          %489 = sbr.rel (%p487) target = $region24
        $region23: #{tpu_custom_call.1} parent=11 // pred_region
          %s491 = ssub.s32 8192, 8192
          %492 = vsyncadd [#allocation9], %s491
          %s493 = sshll.u32 [#allocation10], 4
          %s494 = int_to_ptr.vmem [resolvable:$true] %s493
          %499 = dma.hbm_to_vmem [thread:$0]  %s5, 8192, %s494, [#allocation9], 256, 256, 16
        $region24: #{tpu_custom_call.1} parent=11 // pred_fallthru
          _
        // Predicated region
        $region25: #{tpu_custom_call.1} parent=11 // pred_check
          %p500 = pneg %p198
        $region26: #{tpu_custom_call.1} parent=11 // pred_check_branch
          %502 = sbr.rel (%p500) target = $region28
        $region27: #{tpu_custom_call.1} parent=11 // pred_region
          %s504 = ssub.s32 64, 64
          %505 = vsyncadd [#allocation12], %s504
          %s507 = sshll.u32 [#allocation11], 4
          %s508 = int_to_ptr.vmem [resolvable:$true] %s507
          %510 = dma.hbm_to_vmem [thread:$0]  %s6, 64, %s508, [#allocation12]
        $region28: #{tpu_custom_call.1} parent=11 // pred_fallthru
          _
        // Predicated region
        $region29: #{tpu_custom_call.1} parent=11 // pred_check
          %p511 = pneg %p219
        $region30: #{tpu_custom_call.1} parent=11 // pred_check_branch
          %513 = sbr.rel (%p511) target = $region32
        $region31: #{tpu_custom_call.1} parent=11 // pred_region
          _
        $region32: #{tpu_custom_call.1} parent=11 // pred_fallthru
          _
        // Predicated region
        $region33: #{tpu_custom_call.1} parent=11 // pred_check
          %p514 = pneg %p240
        $region34: #{tpu_custom_call.1} parent=11 // pred_check_branch
          %516 = sbr.rel (%p514) target = $region36
        $region35: #{tpu_custom_call.1} parent=11 // pred_region
          _
        $region36: #{tpu_custom_call.1} parent=11 // pred_fallthru
          _
        // Predicated region
        $region37: #{tpu_custom_call.1} parent=11 // pred_check
          %p517 = pneg %p261
        $region38: #{tpu_custom_call.1} parent=11 // pred_check_branch
          %519 = sbr.rel (%p517) target = $region40
        $region39: #{tpu_custom_call.1} parent=11 // pred_region
          %s521 = ssub.s32 768, 768
          %522 = vsyncadd [#allocation12], %s521
          %s523 = sshll.u32 [#allocation13], 4
          %s524 = int_to_ptr.vmem [resolvable:$true] %s523
          %529 = dma.hbm_to_vmem [thread:$0]  %s9, 768, %s524, [#allocation12], 384, 384, 24
        $region40: #{tpu_custom_call.1} parent=11 // pred_fallthru
          _
        // Predicated region
        $region41: #{tpu_custom_call.1} parent=11 // pred_check
          %p530 = pneg %p282
        $region42: #{tpu_custom_call.1} parent=11 // pred_check_branch
          %532 = sbr.rel (%p530) target = $region44
        $region43: #{tpu_custom_call.1} parent=11 // pred_region
          _
        $region44: #{tpu_custom_call.1} parent=11 // pred_fallthru
          _
        // Predicated region
        $region45: #{tpu_custom_call.1} parent=11 // pred_check
          %p533 = pneg %p303
        $region46: #{tpu_custom_call.1} parent=11 // pred_check_branch
          %535 = sbr.rel (%p533) target = $region48
        $region47: #{tpu_custom_call.1} parent=11 // pred_region
          %s537 = ssub.s32 3072, 3072
          %538 = vsyncadd [#allocation15], %s537
          %s539 = sshll.u32 [#allocation14], 4
          %s540 = int_to_ptr.vmem [resolvable:$true] %s539
          %545 = dma.hbm_to_vmem [thread:$0]  %s11, 3072, %s540, [#allocation15], 192, 192, 12
        $region48: #{tpu_custom_call.1} parent=11 // pred_fallthru
          _
        // Predicated region
        $region49: #{tpu_custom_call.1} parent=11 // pred_check
          %p546 = pneg %p324
        $region50: #{tpu_custom_call.1} parent=11 // pred_check_branch
          %548 = sbr.rel (%p546) target = $region52
        $region51: #{tpu_custom_call.1} parent=11 // pred_region
          _
        $region52: #{tpu_custom_call.1} parent=11 // pred_fallthru
          _
        // Predicated region
        $region53: #{tpu_custom_call.1} parent=11 // pred_check
          %p549 = pneg %p345
        $region54: #{tpu_custom_call.1} parent=11 // pred_check_branch
          %551 = sbr.rel (%p549) target = $region56
        $region55: #{tpu_custom_call.1} parent=11 // pred_region
          _
        $region56: #{tpu_custom_call.1} parent=11 // pred_fallthru
          _
        // Predicated region
        $region57: #{tpu_custom_call.1} parent=11 // pred_check
          %p552 = pneg %p366
        $region58: #{tpu_custom_call.1} parent=11 // pred_check_branch
          %554 = sbr.rel (%p552) target = $region60
        $region59: #{tpu_custom_call.1} parent=11 // pred_region
          _
        $region60: #{tpu_custom_call.1} parent=11 // pred_fallthru
          _
      $region12: #{tpu_custom_call.1} parent=5 // pred_fallthru
        _
      %p555 = scmp.lt.s32.totalorder %s36, 6
      // Predicated region
      $region61: #{tpu_custom_call.1} parent=5 // pred_check
        %p556 = pneg %p555
      $region62: #{tpu_custom_call.1} parent=5 // pred_check_branch
        %558 = sbr.rel (%p556) target = $region64
      $region63: #{tpu_custom_call.1} parent=5 // pred_region
        // Predicated region
        $region65: #{tpu_custom_call.1} parent=63 // pred_check
          %p559 = pneg %p122
        $region66: #{tpu_custom_call.1} parent=63 // pred_check_branch
          %561 = sbr.rel (%p559) target = $region68
        $region67: #{tpu_custom_call.1} parent=63 // pred_region
          %p562 = scmp.lt.s32.totalorder %s44, 5
          %s563 = scalar_select %p562, %s44, 5
          %p564 = scmp.lt.s32.totalorder %s43, 0
          %s565 = scalar_select %p564, %s43, 0
          %s566 = sadd.s32 %s565, %s563
          %s567 = smul.addr %s566, 8
          %s568 = scalar_lea.vmem %s3, %s567
        $region68: #{tpu_custom_call.1} parent=63 // pred_fallthru
          _
        // Predicated region
        $region69: #{tpu_custom_call.1} parent=63 // pred_check
          %p569 = pneg %p150
        $region70: #{tpu_custom_call.1} parent=63 // pred_check_branch
          %571 = sbr.rel (%p569) target = $region72
        $region71: #{tpu_custom_call.1} parent=63 // pred_region
          %p572 = scmp.lt.s32.totalorder %s44, 5
          %s573 = scalar_select %p572, %s44, 5
          %p574 = scmp.lt.s32.totalorder %s43, 0
          %s575 = scalar_select %p574, %s43, 0
          %s576 = sadd.s32 %s575, %s573
          %s577 = smul.addr %s576, 8
          %s578 = scalar_lea.vmem %s4, %s577
        $region72: #{tpu_custom_call.1} parent=63 // pred_fallthru
          _
      $region64: #{tpu_custom_call.1} parent=5 // pred_fallthru
        _
      %p579 = scmp.le.s32.totalorder 1, %s36
      %p580 = scmp.lt.s32.totalorder %s36, 7
      %p581 = pnand %p579, %p580
      %p582 = pneg %p581
      // Predicated region
      $region73: #{tpu_custom_call.1} parent=5 // pred_check
        _
      $region74: #{tpu_custom_call.1} parent=5 // pred_check_branch
        %584 = sbr.rel (%p581) target = $region76
      $region75: #{tpu_custom_call.1} parent=5 // pred_region
        %s585 = ssub.s32 %s36, 1
        // Predicated region
        $region77: #{tpu_custom_call.1} parent=75 // pred_check
          %p586 = pneg %p74
        $region78: #{tpu_custom_call.1} parent=75 // pred_check_branch
          %588 = sbr.rel (%p586) target = $region80
        $region79: #{tpu_custom_call.1} parent=75 // pred_region
          %589 = dma.done [#allocation6], 128
        $region80: #{tpu_custom_call.1} parent=75 // pred_fallthru
          _
        // Predicated region
        $region81: #{tpu_custom_call.1} parent=75 // pred_check
          %p590 = pneg %p100
        $region82: #{tpu_custom_call.1} parent=75 // pred_check_branch
          %592 = sbr.rel (%p590) target = $region84
        $region83: #{tpu_custom_call.1} parent=75 // pred_region
          %593 = dma.done [#allocation9], 128
        $region84: #{tpu_custom_call.1} parent=75 // pred_fallthru
          _
        // Predicated region
        $region85: #{tpu_custom_call.1} parent=75 // pred_check
          %p594 = pneg %p177
        $region86: #{tpu_custom_call.1} parent=75 // pred_check_branch
          %596 = sbr.rel (%p594) target = $region88
        $region87: #{tpu_custom_call.1} parent=75 // pred_region
          %597 = dma.done [#allocation9], 8192
        $region88: #{tpu_custom_call.1} parent=75 // pred_fallthru
          _
        // Predicated region
        $region89: #{tpu_custom_call.1} parent=75 // pred_check
          %p598 = pneg %p198
        $region90: #{tpu_custom_call.1} parent=75 // pred_check_branch
          %600 = sbr.rel (%p598) target = $region92
        $region91: #{tpu_custom_call.1} parent=75 // pred_region
          %601 = dma.done [#allocation12], 64
        $region92: #{tpu_custom_call.1} parent=75 // pred_fallthru
          _
        // Predicated region
        $region93: #{tpu_custom_call.1} parent=75 // pred_check
          %p602 = pneg %p261
        $region94: #{tpu_custom_call.1} parent=75 // pred_check_branch
          %604 = sbr.rel (%p602) target = $region96
        $region95: #{tpu_custom_call.1} parent=75 // pred_region
          %605 = dma.done [#allocation12], 768
        $region96: #{tpu_custom_call.1} parent=75 // pred_fallthru
          _
        // Predicated region
        $region97: #{tpu_custom_call.1} parent=75 // pred_check
          %p606 = pneg %p303
        $region98: #{tpu_custom_call.1} parent=75 // pred_check_branch
          %608 = sbr.rel (%p606) target = $region100
        $region99: #{tpu_custom_call.1} parent=75 // pred_region
          %609 = dma.done [#allocation15], 3072
        $region100: #{tpu_custom_call.1} parent=75 // pred_fallthru
          _
        %p610 = pneg %p74
        %p611 = pneg %p71
        %p612 = pneg %p100
        %p613 = pneg %p97
        %p614 = scmp.lt.s32.totalorder %s46, 5
        %s615 = scalar_select %p614, %s46, 5
        %p616 = scmp.lt.s32.totalorder %s45, 0
        %s617 = scalar_select %p616, %s45, 0
        %s618 = sadd.s32 %s617, %s615
        %s619 = smul.addr %s618, 8
        %s620 = scalar_lea.vmem %s3, %s619
        %p621 = pneg %p128
        %p622 = pneg %p125
        %p623 = scmp.lt.s32.totalorder %s46, 5
        %s624 = scalar_select %p623, %s46, 5
        %p625 = scmp.lt.s32.totalorder %s45, 0
        %s626 = scalar_select %p625, %s45, 0
        %s627 = sadd.s32 %s626, %s624
        %s628 = smul.addr %s627, 8
        %s629 = scalar_lea.vmem %s4, %s628
        %p630 = pneg %p156
        %p631 = pneg %p153
        %p632 = pneg %p177
        %p633 = pneg %p174
        %p634 = pneg %p198
        %p635 = pneg %p195
        %p636 = pneg %p219
        %p637 = pneg %p216
        %p638 = pneg %p240
        %p639 = pneg %p237
        %p640 = pneg %p261
        %p641 = pneg %p258
        %p642 = pneg %p282
        %p643 = pneg %p279
        %p644 = pneg %p303
        %p645 = pneg %p300
        %p646 = pneg %p324
        %p647 = pneg %p321
        %p648 = pneg %p345
        %p649 = pneg %p342
        %p650 = pneg %p366
        %p651 = pneg %p363
        %p652 = pneg %p394
        %p653 = pneg %p391
        %s654 = sand.u32 %s381, 1
        %s655 = scalar_lea.sflag [#allocation7], %s654
        %s656 = sand.u32 %s381, 1
        %s657 = smul.addr %s656, 8
        %s658 = scalar_lea.vmem [#allocation16], %s657
        %p659 = pneg %p420
        %p660 = pneg %p417
        %p661 = pneg %p446
        %p662 = pneg %p443
        %p663 = scmp.lt.s32.totalorder %s46, 5
        %s664 = scalar_select %p663, %s46, 5
        %p665 = scmp.lt.s32.totalorder %s45, 0
        %s666 = scalar_select %p665, %s45, 0
        %s667 = sadd.s32 %s666, %s664
        %s668 = smul.addr %s667, 8
        %s669 = scalar_lea.vmem %s3, %s668
        %p670 = scmp.lt.s32.totalorder %s46, 5
        %s671 = scalar_select %p670, %s46, 5
        %p672 = scmp.lt.s32.totalorder %s45, 0
        %s673 = scalar_select %p672, %s45, 0
        %s674 = sadd.s32 %s673, %s671
        %s675 = smul.addr %s674, 8
        %s676 = scalar_lea.vmem %s4, %s675
        %p678 = scmp.eq.s32.totalorder %s46, 0
        // Predicated region
        $region101: #{tpu_custom_call.1} parent=75 // pred_check
          %p679 = pneg %p678
        $region102: #{tpu_custom_call.1} parent=75 // pred_check_branch
          %681 = sbr.rel (%p679) target = $region104
        $region103: #{tpu_custom_call.1} parent=75 // pred_region
          %v682 = vld [vmem:[#allocation5] sm:$0xff]
          %683 = vst [vmem:[#allocation17] sm:$0xff] %v682
          %v684 = vld [vmem:[#allocation8] sm:$0xff]
          %685 = vst [vmem:[#allocation19] sm:$0xff] %v684
        $region104: #{tpu_custom_call.1} parent=75 // pred_fallthru
          _
        %v686 = vld [vmem:[#allocation17] sm:$0xff]
        %v687 = vld [vmem:[#allocation19] sm:$0xff]
        %v688 = vld [vmem:[%s669] sm:$0xff]
        %v689 = vld [vmem:[%s676] sm:$0xff]
        %v690 = vpack.c.bf16 %v686, %v686
        %v691 = vpack.c.bf16 %v687, %v687
        %v692 = vld [vmem:[#allocation10] sm:$0xff]
        %v693 = vld [vmem:[#allocation10 + $0x8] sm:$0xff]
        %v694 = vld [vmem:[#allocation10 + $0x10] sm:$0xff]
        %v695 = vld [vmem:[#allocation10 + $0x18] sm:$0xff]
        %v696 = vld [vmem:[#allocation10 + $0x20] sm:$0xff]
        %v697 = vld [vmem:[#allocation10 + $0x28] sm:$0xff]
        %v698 = vld [vmem:[#allocation10 + $0x30] sm:$0xff]
        %v699 = vld [vmem:[#allocation10 + $0x38] sm:$0xff]
        %v700 = vld [vmem:[#allocation10 + $0x40] sm:$0xff]
        %v701 = vld [vmem:[#allocation10 + $0x48] sm:$0xff]
        %v702 = vld [vmem:[#allocation10 + $0x50] sm:$0xff]
        %v703 = vld [vmem:[#allocation10 + $0x58] sm:$0xff]
        %v704 = vld [vmem:[#allocation10 + $0x60] sm:$0xff]
        %v705 = vld [vmem:[#allocation10 + $0x68] sm:$0xff]
        %v706 = vld [vmem:[#allocation10 + $0x70] sm:$0xff]
        %v707 = vld [vmem:[#allocation10 + $0x78] sm:$0xff]
        %v708 = vld [vmem:[#allocation10 + $0x80] sm:$0xff]
        %v709 = vld [vmem:[#allocation10 + $0x88] sm:$0xff]
        %v710 = vld [vmem:[#allocation10 + $0x90] sm:$0xff]
        %v711 = vld [vmem:[#allocation10 + $0x98] sm:$0xff]
        %v712 = vld [vmem:[#allocation10 + $0xa0] sm:$0xff]
        %v713 = vld [vmem:[#allocation10 + $0xa8] sm:$0xff]
        %v714 = vld [vmem:[#allocation10 + $0xb0] sm:$0xff]
        %v715 = vld [vmem:[#allocation10 + $0xb8] sm:$0xff]
        %v716 = vld [vmem:[#allocation10 + $0xc0] sm:$0xff]
        %v717 = vld [vmem:[#allocation10 + $0xc8] sm:$0xff]
        %v718 = vld [vmem:[#allocation10 + $0xd0] sm:$0xff]
        %v719 = vld [vmem:[#allocation10 + $0xd8] sm:$0xff]
        %v720 = vld [vmem:[#allocation10 + $0xe0] sm:$0xff]
        %v721 = vld [vmem:[#allocation10 + $0xe8] sm:$0xff]
        %v722 = vld [vmem:[#allocation10 + $0xf0] sm:$0xff]
        %v723 = vld [vmem:[#allocation10 + $0xf8] sm:$0xff]
        %v724 = vld [vmem:[#allocation10 + $0x100] sm:$0xff]
        %v725 = vld [vmem:[#allocation10 + $0x108] sm:$0xff]
        %v726 = vld [vmem:[#allocation10 + $0x110] sm:$0xff]
        %v727 = vld [vmem:[#allocation10 + $0x118] sm:$0xff]
        %v728 = vld [vmem:[#allocation10 + $0x120] sm:$0xff]
        %v729 = vld [vmem:[#allocation10 + $0x128] sm:$0xff]
        %v730 = vld [vmem:[#allocation10 + $0x130] sm:$0xff]
        %v731 = vld [vmem:[#allocation10 + $0x138] sm:$0xff]
        %v732 = vld [vmem:[#allocation10 + $0x140] sm:$0xff]
        %v733 = vld [vmem:[#allocation10 + $0x148] sm:$0xff]
        %v734 = vld [vmem:[#allocation10 + $0x150] sm:$0xff]
        %v735 = vld [vmem:[#allocation10 + $0x158] sm:$0xff]
        %v736 = vld [vmem:[#allocation10 + $0x160] sm:$0xff]
        %v737 = vld [vmem:[#allocation10 + $0x168] sm:$0xff]
        %v738 = vld [vmem:[#allocation10 + $0x170] sm:$0xff]
        %v739 = vld [vmem:[#allocation10 + $0x178] sm:$0xff]
        %v740 = vld [vmem:[#allocation10 + $0x180] sm:$0xff]
        %v741 = vld [vmem:[#allocation10 + $0x188] sm:$0xff]
        %v742 = vld [vmem:[#allocation10 + $0x190] sm:$0xff]
        %v743 = vld [vmem:[#allocation10 + $0x198] sm:$0xff]
        %v744 = vld [vmem:[#allocation10 + $0x1a0] sm:$0xff]
        %v745 = vld [vmem:[#allocation10 + $0x1a8] sm:$0xff]
        %v746 = vld [vmem:[#allocation10 + $0x1b0] sm:$0xff]
        %v747 = vld [vmem:[#allocation10 + $0x1b8] sm:$0xff]
        %v748 = vld [vmem:[#allocation10 + $0x1c0] sm:$0xff]
        %v749 = vld [vmem:[#allocation10 + $0x1c8] sm:$0xff]
        %v750 = vld [vmem:[#allocation10 + $0x1d0] sm:$0xff]
        %v751 = vld [vmem:[#allocation10 + $0x1d8] sm:$0xff]
        %v752 = vld [vmem:[#allocation10 + $0x1e0] sm:$0xff]
        %v753 = vld [vmem:[#allocation10 + $0x1e8] sm:$0xff]
        %v754 = vld [vmem:[#allocation10 + $0x1f0] sm:$0xff]
        %v755 = vld [vmem:[#allocation10 + $0x1f8] sm:$0xff]
        %v756 = vld [vmem:[#allocation11] sm:$0xf]
        %v758 = vlaneseq
        %v759 = vshrl.u32 %v758, 7
        %v760 = vsub.s32 0, %v759
        %v761 = vrot.slane %v756, %v760
        %v762 = vlaneseq
        %v763 = vshrl.u32 %v762, 7
        %v764 = vsub.s32 1, %v763
        %v765 = vrot.slane %v756, %v764
        %v766 = vlaneseq
        %v767 = vshrl.u32 %v766, 7
        %v768 = vsub.s32 2, %v767
        %v769 = vrot.slane %v756, %v768
        %v770 = vlaneseq
        %v771 = vshrl.u32 %v770, 7
        %v772 = vsub.s32 3, %v771
        %v773 = vrot.slane %v756, %v772
        %v842 = vunpack.c.l.b16 %v692
        %v843 = vunpack.c.h.b16 %v692
        %v844 = vunpack.c.l.b16 %v693
        %v845 = vunpack.c.h.b16 %v693
        %v846 = vunpack.c.l.b16 %v694
        %v847 = vunpack.c.h.b16 %v694
        %v848 = vunpack.c.l.b16 %v695
        %v849 = vunpack.c.h.b16 %v695
        %v850 = vunpack.c.l.b16 %v696
        %v851 = vunpack.c.h.b16 %v696
        %v852 = vunpack.c.l.b16 %v697
        %v853 = vunpack.c.h.b16 %v697
        %v854 = vunpack.c.l.b16 %v698
        %v855 = vunpack.c.h.b16 %v698
        %v856 = vunpack.c.l.b16 %v699
        %v857 = vunpack.c.h.b16 %v699
        %v858 = vunpack.c.l.b16 %v700
        %v859 = vunpack.c.h.b16 %v700
        %v860 = vunpack.c.l.b16 %v701
        %v861 = vunpack.c.h.b16 %v701
        %v862 = vunpack.c.l.b16 %v702
        %v863 = vunpack.c.h.b16 %v702
        %v864 = vunpack.c.l.b16 %v703
        %v865 = vunpack.c.h.b16 %v703
        %v866 = vunpack.c.l.b16 %v704
        %v867 = vunpack.c.h.b16 %v704
        %v868 = vunpack.c.l.b16 %v705
        %v869 = vunpack.c.h.b16 %v705
        %v870 = vunpack.c.l.b16 %v706
        %v871 = vunpack.c.h.b16 %v706
        %v872 = vunpack.c.l.b16 %v707
        %v873 = vunpack.c.h.b16 %v707
        %v874 = vunpack.c.l.b16 %v708
        %v875 = vunpack.c.h.b16 %v708
        %v876 = vunpack.c.l.b16 %v709
        %v877 = vunpack.c.h.b16 %v709
        %v878 = vunpack.c.l.b16 %v710
        %v879 = vunpack.c.h.b16 %v710
        %v880 = vunpack.c.l.b16 %v711
        %v881 = vunpack.c.h.b16 %v711
        %v882 = vunpack.c.l.b16 %v712
        %v883 = vunpack.c.h.b16 %v712
        %v884 = vunpack.c.l.b16 %v713
        %v885 = vunpack.c.h.b16 %v713
        %v886 = vunpack.c.l.b16 %v714
        %v887 = vunpack.c.h.b16 %v714
        %v888 = vunpack.c.l.b16 %v715
        %v889 = vunpack.c.h.b16 %v715
        %v890 = vunpack.c.l.b16 %v716
        %v891 = vunpack.c.h.b16 %v716
        %v892 = vunpack.c.l.b16 %v717
        %v893 = vunpack.c.h.b16 %v717
        %v894 = vunpack.c.l.b16 %v718
        %v895 = vunpack.c.h.b16 %v718
        %v896 = vunpack.c.l.b16 %v719
        %v897 = vunpack.c.h.b16 %v719
        %v898 = vunpack.c.l.b16 %v720
        %v899 = vunpack.c.h.b16 %v720
        %v900 = vunpack.c.l.b16 %v721
        %v901 = vunpack.c.h.b16 %v721
        %v902 = vunpack.c.l.b16 %v722
        %v903 = vunpack.c.h.b16 %v722
        %v904 = vunpack.c.l.b16 %v723
        %v905 = vunpack.c.h.b16 %v723
        %v906 = vunpack.c.l.b16 %v724
        %v907 = vunpack.c.h.b16 %v724
        %v908 = vunpack.c.l.b16 %v725
        %v909 = vunpack.c.h.b16 %v725
        %v910 = vunpack.c.l.b16 %v726
        %v911 = vunpack.c.h.b16 %v726
        %v912 = vunpack.c.l.b16 %v727
        %v913 = vunpack.c.h.b16 %v727
        %v914 = vunpack.c.l.b16 %v728
        %v915 = vunpack.c.h.b16 %v728
        %v916 = vunpack.c.l.b16 %v729
        %v917 = vunpack.c.h.b16 %v729
        %v918 = vunpack.c.l.b16 %v730
        %v919 = vunpack.c.h.b16 %v730
        %v920 = vunpack.c.l.b16 %v731
        %v921 = vunpack.c.h.b16 %v731
        %v922 = vunpack.c.l.b16 %v732
        %v923 = vunpack.c.h.b16 %v732
        %v924 = vunpack.c.l.b16 %v733
        %v925 = vunpack.c.h.b16 %v733
        %v926 = vunpack.c.l.b16 %v734
        %v927 = vunpack.c.h.b16 %v734
        %v928 = vunpack.c.l.b16 %v735
        %v929 = vunpack.c.h.b16 %v735
        %v930 = vunpack.c.l.b16 %v736
        %v931 = vunpack.c.h.b16 %v736
        %v932 = vunpack.c.l.b16 %v737
        %v933 = vunpack.c.h.b16 %v737
        %v934 = vunpack.c.l.b16 %v738
        %v935 = vunpack.c.h.b16 %v738
        %v936 = vunpack.c.l.b16 %v739
        %v937 = vunpack.c.h.b16 %v739
        %v938 = vunpack.c.l.b16 %v740
        %v939 = vunpack.c.h.b16 %v740
        %v940 = vunpack.c.l.b16 %v741
        %v941 = vunpack.c.h.b16 %v741
        %v942 = vunpack.c.l.b16 %v742
        %v943 = vunpack.c.h.b16 %v742
        %v944 = vunpack.c.l.b16 %v743
        %v945 = vunpack.c.h.b16 %v743
        %v946 = vunpack.c.l.b16 %v744
        %v947 = vunpack.c.h.b16 %v744
        %v948 = vunpack.c.l.b16 %v745
        %v949 = vunpack.c.h.b16 %v745
        %v950 = vunpack.c.l.b16 %v746
        %v951 = vunpack.c.h.b16 %v746
        %v952 = vunpack.c.l.b16 %v747
        %v953 = vunpack.c.h.b16 %v747
        %v954 = vunpack.c.l.b16 %v748
        %v955 = vunpack.c.h.b16 %v748
        %v956 = vunpack.c.l.b16 %v749
        %v957 = vunpack.c.h.b16 %v749
        %v958 = vunpack.c.l.b16 %v750
        %v959 = vunpack.c.h.b16 %v750
        %v960 = vunpack.c.l.b16 %v751
        %v961 = vunpack.c.h.b16 %v751
        %v962 = vunpack.c.l.b16 %v752
        %v963 = vunpack.c.h.b16 %v752
        %v964 = vunpack.c.l.b16 %v753
        %v965 = vunpack.c.h.b16 %v753
        %v966 = vunpack.c.l.b16 %v754
        %v967 = vunpack.c.h.b16 %v754
        %v968 = vunpack.c.l.b16 %v755
        %v969 = vunpack.c.h.b16 %v755
        %v970 = vpack.c.b16 %v846, %v842
        %v971 = vpack.c.b16 %v847, %v843
        %v972 = vpack.c.b16 %v848, %v844
        %v973 = vpack.c.b16 %v849, %v845
        %v974 = vpack.c.b16 %v854, %v850
        %v975 = vpack.c.b16 %v855, %v851
        %v976 = vpack.c.b16 %v856, %v852
        %v977 = vpack.c.b16 %v857, %v853
        %v978 = vpack.c.b16 %v862, %v858
        %v979 = vpack.c.b16 %v863, %v859
        %v980 = vpack.c.b16 %v864, %v860
        %v981 = vpack.c.b16 %v865, %v861
        %v982 = vpack.c.b16 %v870, %v866
        %v983 = vpack.c.b16 %v871, %v867
        %v984 = vpack.c.b16 %v872, %v868
        %v985 = vpack.c.b16 %v873, %v869
        %v986 = vpack.c.b16 %v878, %v874
        %v987 = vpack.c.b16 %v879, %v875
        %v988 = vpack.c.b16 %v880, %v876
        %v989 = vpack.c.b16 %v881, %v877
        %v990 = vpack.c.b16 %v886, %v882
        %v991 = vpack.c.b16 %v887, %v883
        %v992 = vpack.c.b16 %v888, %v884
        %v993 = vpack.c.b16 %v889, %v885
        %v994 = vpack.c.b16 %v894, %v890
        %v995 = vpack.c.b16 %v895, %v891
        %v996 = vpack.c.b16 %v896, %v892
        %v997 = vpack.c.b16 %v897, %v893
        %v998 = vpack.c.b16 %v902, %v898
        %v999 = vpack.c.b16 %v903, %v899
        %v1000 = vpack.c.b16 %v904, %v900
        %v1001 = vpack.c.b16 %v905, %v901
        %v1002 = vpack.c.b16 %v910, %v906
        %v1003 = vpack.c.b16 %v911, %v907
        %v1004 = vpack.c.b16 %v912, %v908
        %v1005 = vpack.c.b16 %v913, %v909
        %v1006 = vpack.c.b16 %v918, %v914
        %v1007 = vpack.c.b16 %v919, %v915
        %v1008 = vpack.c.b16 %v920, %v916
        %v1009 = vpack.c.b16 %v921, %v917
        %v1010 = vpack.c.b16 %v926, %v922
        %v1011 = vpack.c.b16 %v927, %v923
        %v1012 = vpack.c.b16 %v928, %v924
        %v1013 = vpack.c.b16 %v929, %v925
        %v1014 = vpack.c.b16 %v934, %v930
        %v1015 = vpack.c.b16 %v935, %v931
        %v1016 = vpack.c.b16 %v936, %v932
        %v1017 = vpack.c.b16 %v937, %v933
        %v1018 = vpack.c.b16 %v942, %v938
        %v1019 = vpack.c.b16 %v943, %v939
        %v1020 = vpack.c.b16 %v944, %v940
        %v1021 = vpack.c.b16 %v945, %v941
        %v1022 = vpack.c.b16 %v950, %v946
        %v1023 = vpack.c.b16 %v951, %v947
        %v1024 = vpack.c.b16 %v952, %v948
        %v1025 = vpack.c.b16 %v953, %v949
        %v1026 = vpack.c.b16 %v958, %v954
        %v1027 = vpack.c.b16 %v959, %v955
        %v1028 = vpack.c.b16 %v960, %v956
        %v1029 = vpack.c.b16 %v961, %v957
        %v1030 = vpack.c.b16 %v966, %v962
        %v1031 = vpack.c.b16 %v967, %v963
        %v1032 = vpack.c.b16 %v968, %v964
        %v1033 = vpack.c.b16 %v969, %v965
        %1098 = vmatprep.subr.bf16.mxu0 %v971
        %1099 = vmatpush1.bf16.msra.mxu0 %v970
        %1100 = vmatprep.subr.bf16.mxu0 %v975
        %1101 = vmatpush1.bf16.msra.mxu0 %v974
        %1102 = vmatprep.subr.bf16.mxu0 %v979
        %1103 = vmatpush1.bf16.msra.mxu0 %v978
        %1104 = vmatprep.subr.bf16.mxu0 %v983
        %1105 = vmatpush1.bf16.msra.mxu0 %v982
        %1106 = vmatprep.subr.bf16.mxu0 %v987
        %1107 = vmatpush1.bf16.msra.mxu0 %v986
        %1108 = vmatprep.subr.bf16.mxu0 %v991
        %1109 = vmatpush1.bf16.msra.mxu0 %v990
        %1110 = vmatprep.subr.bf16.mxu0 %v995
        %1111 = vmatpush1.bf16.msra.mxu0 %v994
        %1112 = vmatprep.subr.bf16.mxu0 %v999
        %1113 = vmatpush1.bf16.msra.mxu0 %v998
        %1114 = vmatprep.subr.bf16.mxu0 %v1003
        %1115 = vmatpush1.bf16.msra.mxu0 %v1002
        %1116 = vmatprep.subr.bf16.mxu0 %v1007
        %1117 = vmatpush1.bf16.msra.mxu0 %v1006
        %1118 = vmatprep.subr.bf16.mxu0 %v1011
        %1119 = vmatpush1.bf16.msra.mxu0 %v1010
        %1120 = vmatprep.subr.bf16.mxu0 %v1015
        %1121 = vmatpush1.bf16.msra.mxu0 %v1014
        %1122 = vmatprep.subr.bf16.mxu0 %v1019
        %1123 = vmatpush1.bf16.msra.mxu0 %v1018
        %1124 = vmatprep.subr.bf16.mxu0 %v1023
        %1125 = vmatpush1.bf16.msra.mxu0 %v1022
        %1126 = vmatprep.subr.bf16.mxu0 %v1027
        %1127 = vmatpush1.bf16.msra.mxu0 %v1026
        %1128 = vmatprep.subr.bf16.mxu0 %v1031
        %1129 = vmatpush1.bf16.msra.mxu0 %v1030
        %1130 = vmatprep.mubr.bf16.mxu0 %v691
        %1131 = vmatmul.mubr.bf16.gmra.mrb[0].mxu0 %v690
        %v1132 = vpop.f32.mrb[0].mxu0
        %v1133 = vadd.f32 %v761, %v1132
        %v1134 = vpop.f32.mrb[0].mxu0
        %v1135 = vadd.f32 %v765, %v1134
        %v1136 = vpop.f32.mrb[0].mxu0
        %v1137 = vpop.f32.mrb[0].mxu0
        %1138 = vdwg.mxu0
        %1139 = vmatprep.subr.bf16.mxu0 %v973
        %1140 = vmatpush1.bf16.msra.mxu0 %v972
        %1141 = vmatprep.subr.bf16.mxu0 %v977
        %1142 = vmatpush1.bf16.msra.mxu0 %v976
        %1143 = vmatprep.subr.bf16.mxu0 %v981
        %1144 = vmatpush1.bf16.msra.mxu0 %v980
        %1145 = vmatprep.subr.bf16.mxu0 %v985
        %1146 = vmatpush1.bf16.msra.mxu0 %v984
        %1147 = vmatprep.subr.bf16.mxu0 %v989
        %1148 = vmatpush1.bf16.msra.mxu0 %v988
        %1149 = vmatprep.subr.bf16.mxu0 %v993
        %1150 = vmatpush1.bf16.msra.mxu0 %v992
        %1151 = vmatprep.subr.bf16.mxu0 %v997
        %1152 = vmatpush1.bf16.msra.mxu0 %v996
        %1153 = vmatprep.subr.bf16.mxu0 %v1001
        %1154 = vmatpush1.bf16.msra.mxu0 %v1000
        %1155 = vmatprep.subr.bf16.mxu0 %v1005
        %1156 = vmatpush1.bf16.msra.mxu0 %v1004
        %1157 = vmatprep.subr.bf16.mxu0 %v1009
        %1158 = vmatpush1.bf16.msra.mxu0 %v1008
        %1159 = vmatprep.subr.bf16.mxu0 %v1013
        %1160 = vmatpush1.bf16.msra.mxu0 %v1012
        %1161 = vmatprep.subr.bf16.mxu0 %v1017
        %1162 = vmatpush1.bf16.msra.mxu0 %v1016
        %1163 = vmatprep.subr.bf16.mxu0 %v1021
        %1164 = vmatpush1.bf16.msra.mxu0 %v1020
        %1165 = vmatprep.subr.bf16.mxu0 %v1025
        %1166 = vmatpush1.bf16.msra.mxu0 %v1024
        %1167 = vmatprep.subr.bf16.mxu0 %v1029
        %1168 = vmatpush1.bf16.msra.mxu0 %v1028
        %1169 = vmatprep.subr.bf16.mxu0 %v1033
        %1170 = vmatpush1.bf16.msra.mxu0 %v1032
        %1171 = vmatprep.mubr.bf16.mxu0 %v691
        %1172 = vmatmul.mubr.bf16.gmra.mrb[0].mxu0 %v690
        %v1173 = vpop.f32.mrb[0].mxu0
        %v1174 = vadd.f32 %v769, %v1173
        %v1175 = vpop.f32.mrb[0].mxu0
        %v1176 = vadd.f32 %v773, %v1175
        %v1177 = vpop.f32.mrb[0].mxu0
        %v1178 = vpop.f32.mrb[0].mxu0
        %1179 = vdwg.mxu0
        %v1180 = vxor.u32 %v1133, 2147483648
        %v1181 = vmul.f32 %v1180, 1.442695
        %v1182 = vpow.pop %v1181
        %v1183 = vadd.f32 %v1182, 1.0
        %v1184 = vrcp.pop %v1183
        %v1185 = vmul.f32 1.0, %v1184
        %v1186 = vxor.u32 %v1135, 2147483648
        %v1187 = vmul.f32 %v1186, 1.442695
        %v1188 = vpow.pop %v1187
        %v1189 = vadd.f32 %v1188, 1.0
        %v1190 = vrcp.pop %v1189
        %v1191 = vmul.f32 1.0, %v1190
        %v1192 = vmul.f32 %v1185, %v1176
        %v1193 = vadd.f32 %v1174, %v1192
        %v1194 = vtanh.pop %v1193
        %v1195 = vsub.f32 1.0, %v1191
        %v1196 = vmul.f32 %v1195, %v1194
        %v1197 = vmul.f32 %v1191, %v687
        %v1198 = vadd.f32 %v1196, %v1197
        %1200 = vset.pattern.permute.xlu0 0
        %1201 = vperm.xlu0 %1200, %v688
        %v1202 = vpop.permute.xlu0 %1201
        %v1204 = vmul.f32 %v1202, %v1198
        %v1205 = vsub.f32 1.0, %v688
        %1207 = vset.pattern.permute.xlu0 0
        %1208 = vperm.xlu0 %1207, %v1205
        %v1209 = vpop.permute.xlu0 %1208
        %v1211 = vmul.f32 %v1209, %v687
        %v1212 = vadd.f32 %v1204, %v1211
        %v1213 = vsub.f32 1.0, %v689
        %1215 = vset.pattern.permute.xlu0 0
        %1216 = vperm.xlu0 %1215, %v1213
        %v1217 = vpop.permute.xlu0 %1216
        %v1219 = vmul.f32 %v1217, %v1212
        %v1220 = vpack.c.bf16 %v1219, %v1219
        %v1221 = vld [vmem:[%s7] sm:$0xf]
        %v1222 = vld [vmem:[%s7 + $0x4] sm:$0xf]
        %v1223 = vld [vmem:[%s7 + $0x8] sm:$0xf]
        %v1224 = vld [vmem:[%s7 + $0xc] sm:$0xf]
        %v1225 = vld [vmem:[%s7 + $0x10] sm:$0xf]
        %v1226 = vld [vmem:[%s7 + $0x14] sm:$0xf]
        %v1227 = vld [vmem:[%s7 + $0x18] sm:$0xf]
        %v1228 = vld [vmem:[%s7 + $0x1c] sm:$0xf]
        %v1229 = vld [vmem:[%s7 + $0x20] sm:$0xf]
        %v1230 = vld [vmem:[%s7 + $0x24] sm:$0xf]
        %v1231 = vld [vmem:[%s7 + $0x28] sm:$0xf]
        %v1232 = vld [vmem:[%s7 + $0x2c] sm:$0xf]
        %v1233 = vld [vmem:[%s7 + $0x30] sm:$0xf]
        %v1234 = vld [vmem:[%s7 + $0x34] sm:$0xf]
        %v1235 = vld [vmem:[%s7 + $0x38] sm:$0xf]
        %v1236 = vld [vmem:[%s7 + $0x3c] sm:$0xf]
        %v1237 = vld [vmem:[%s8] sm:$0x1]
        %v1239 = vlaneseq
        %v1240 = vshrl.u32 %v1239, 7
        %v1241 = vsub.s32 0, %v1240
        %v1242 = vrot.slane %v1237, %v1241
        %v1260 = vunpack.c.l.b16 %v1221
        %v1261 = vunpack.c.l.b16 %v1222
        %v1262 = vunpack.c.l.b16 %v1223
        %v1263 = vunpack.c.l.b16 %v1224
        %v1264 = vunpack.c.l.b16 %v1225
        %v1265 = vunpack.c.l.b16 %v1226
        %v1266 = vunpack.c.l.b16 %v1227
        %v1267 = vunpack.c.l.b16 %v1228
        %v1268 = vunpack.c.l.b16 %v1229
        %v1269 = vunpack.c.l.b16 %v1230
        %v1270 = vunpack.c.l.b16 %v1231
        %v1271 = vunpack.c.l.b16 %v1232
        %v1272 = vunpack.c.l.b16 %v1233
        %v1273 = vunpack.c.l.b16 %v1234
        %v1274 = vunpack.c.l.b16 %v1235
        %v1275 = vunpack.c.l.b16 %v1236
        %v1276 = vpack.c.b16 %v1261, %v1260
        %v1277 = vpack.c.b16 %v1263, %v1262
        %v1278 = vpack.c.b16 %v1265, %v1264
        %v1279 = vpack.c.b16 %v1267, %v1266
        %v1280 = vpack.c.b16 %v1269, %v1268
        %v1281 = vpack.c.b16 %v1271, %v1270
        %v1282 = vpack.c.b16 %v1273, %v1272
        %v1283 = vpack.c.b16 %v1275, %v1274
        %1292 = vmatprep.subr.bf16.mxu0 0
        %1293 = vmatpush1.bf16.msra.mxu0 %v1276
        %1294 = vmatprep.subr.bf16.mxu0 0
        %1295 = vmatpush1.bf16.msra.mxu0 %v1277
        %1296 = vmatprep.subr.bf16.mxu0 0
        %1297 = vmatpush1.bf16.msra.mxu0 %v1278
        %1298 = vmatprep.subr.bf16.mxu0 0
        %1299 = vmatpush1.bf16.msra.mxu0 %v1279
        %1300 = vmatprep.subr.bf16.mxu0 0
        %1301 = vmatpush1.bf16.msra.mxu0 %v1280
        %1302 = vmatprep.subr.bf16.mxu0 0
        %1303 = vmatpush1.bf16.msra.mxu0 %v1281
        %1304 = vmatprep.subr.bf16.mxu0 0
        %1305 = vmatpush1.bf16.msra.mxu0 %v1282
        %1306 = vmatprep.subr.bf16.mxu0 0
        %1307 = vmatpush1.bf16.msra.mxu0 %v1283
        %1308 = vmatprep.subr.bf16.mxu0 0
        %1309 = vmatpush1.bf16.msra.mxu0 0
        %1310 = vmatprep.subr.bf16.mxu0 0
        %1311 = vmatpush1.bf16.msra.mxu0 0
        %1312 = vmatprep.subr.bf16.mxu0 0
        %1313 = vmatpush1.bf16.msra.mxu0 0
        %1314 = vmatprep.subr.bf16.mxu0 0
        %1315 = vmatpush1.bf16.msra.mxu0 0
        %1316 = vmatprep.subr.bf16.mxu0 0
        %1317 = vmatpush1.bf16.msra.mxu0 0
        %1318 = vmatprep.subr.bf16.mxu0 0
        %1319 = vmatpush1.bf16.msra.mxu0 0
        %1320 = vmatprep.subr.bf16.mxu0 0
        %1321 = vmatpush1.bf16.msra.mxu0 0
        %1322 = vmatprep.subr.bf16.mxu0 0
        %1323 = vmatpush1.bf16.msra.mxu0 0
        %1324 = vmatprep.mubr.bf16.mxu0 0
        %1325 = vmatmul.mubr.bf16.gmra.mrb[0].mxu0 %v1220
        %v1326 = vpop.f32.mrb[0].mxu0
        %v1327 = vadd.f32 %v1242, %v1326
        %v1328 = vpop.f32.mrb[0].mxu0
        %v1329 = vpop.f32.mrb[0].mxu0
        %v1330 = vpop.f32.mrb[0].mxu0
        %1331 = vdwg.mxu0
        %v1332 = vtanh.pop %v1327
        %v1333 = vmul.f32 %v1202, %v1332
        %v1334 = vmul.f32 %v1209, %v686
        %v1335 = vadd.f32 %v1333, %v1334
        %v1336 = vmul.f32 %v1217, %v1335
        %s1337 = smul.u32 %s45, 8
        %s1338 = sshra.s32 %s1337, 7
        %s1339 = sand.u32 %s1337, 127
        %s1340 = sadd.s32 %s1338, %s46
        %s1341 = smul.u32 %s1340, 128
        %s1342 = sshra.s32 %s1337, 7
        %s1343 = sand.u32 %s1337, 127
        %s1344 = sadd.s32 %s1341, %s1343
        %s1345 = sld [smem:[#allocation4 + %s1344]]
        %s1346 = sshra.s32 %s1345, 3
        %s1347 = sand.u32 %s1345, 7
        %s1348 = sshra.s32 %s1345, 3
        %s1349 = sand.u32 %s1345, 7
        %s1350 = smul.u32 %s1346, 3
        %s1351 = smul.u32 %s1350, 8
        %s1352 = sadd.s32 %s1351, %s1349
        %s1353 = scalar_lea.vmem [#allocation13], %s1352
        %v1354 = vld [vmem:[%s1353] ss:$8 sm:$0x7]
        %v1355 = vlaneseq
        %vm1356 = vcmp.ge.s32.totalorder %v1355, 0
        %vm1357 = vcmp.lt.s32.totalorder %v1355, 384
        %vm1358 = vmand %vm1356, %vm1357
        %1359 = vst.msk [vmem:[#allocation2] ss:$8 sm:$0x7] %vm1358, %v1354
        %1360 = vst.msk [vmem:[#allocation2] ss:$8 sm:$0x0] %vm1358, %v1354
        %s1361 = sadd.s32 %s1337, 1
        %s1362 = sshra.s32 %s1361, 7
        %s1363 = sand.u32 %s1361, 127
        %s1364 = sadd.s32 %s1362, %s46
        %s1365 = smul.u32 %s1364, 128
        %s1366 = sshra.s32 %s1361, 7
        %s1367 = sand.u32 %s1361, 127
        %s1368 = sadd.s32 %s1365, %s1367
        %s1369 = sld [smem:[#allocation4 + %s1368]]
        %s1370 = sshra.s32 %s1369, 3
        %s1371 = sand.u32 %s1369, 7
        %s1372 = sshra.s32 %s1369, 3
        %s1373 = sand.u32 %s1369, 7
        %s1374 = smul.u32 %s1370, 3
        %s1375 = smul.u32 %s1374, 8
        %s1376 = sadd.s32 %s1375, %s1373
        %s1377 = scalar_lea.vmem [#allocation13], %s1376
        %v1378 = vld [vmem:[%s1377] ss:$8 sm:$0x7]
        %s1379 = scalar_lea.vmem [#allocation2], 1
        %1380 = vst.msk [vmem:[%s1379] ss:$8 sm:$0x7] %vm1358, %v1378
        %1381 = vst.msk [vmem:[%s1379] ss:$8 sm:$0x0] %vm1358, %v1378
        %s1382 = sadd.s32 %s1337, 2
        %s1383 = sshra.s32 %s1382, 7
        %s1384 = sand.u32 %s1382, 127
        %s1385 = sadd.s32 %s1383, %s46
        %s1386 = smul.u32 %s1385, 128
        %s1387 = sshra.s32 %s1382, 7
        %s1388 = sand.u32 %s1382, 127
        %s1389 = sadd.s32 %s1386, %s1388
        %s1390 = sld [smem:[#allocation4 + %s1389]]
        %s1391 = sshra.s32 %s1390, 3
        %s1392 = sand.u32 %s1390, 7
        %s1393 = sshra.s32 %s1390, 3
        %s1394 = sand.u32 %s1390, 7
        %s1395 = smul.u32 %s1391, 3
        %s1396 = smul.u32 %s1395, 8
        %s1397 = sadd.s32 %s1396, %s1394
        %s1398 = scalar_lea.vmem [#allocation13], %s1397
        %v1399 = vld [vmem:[%s1398] ss:$8 sm:$0x7]
        %s1400 = scalar_lea.vmem [#allocation2], 2
        %1401 = vst.msk [vmem:[%s1400] ss:$8 sm:$0x7] %vm1358, %v1399
        %1402 = vst.msk [vmem:[%s1400] ss:$8 sm:$0x0] %vm1358, %v1399
        %s1403 = sadd.s32 %s1337, 3
        %s1404 = sshra.s32 %s1403, 7
        %s1405 = sand.u32 %s1403, 127
        %s1406 = sadd.s32 %s1404, %s46
        %s1407 = smul.u32 %s1406, 128
        %s1408 = sshra.s32 %s1403, 7
        %s1409 = sand.u32 %s1403, 127
        %s1410 = sadd.s32 %s1407, %s1409
        %s1411 = sld [smem:[#allocation4 + %s1410]]
        %s1412 = sshra.s32 %s1411, 3
        %s1413 = sand.u32 %s1411, 7
        %s1414 = sshra.s32 %s1411, 3
        %s1415 = sand.u32 %s1411, 7
        %s1416 = smul.u32 %s1412, 3
        %s1417 = smul.u32 %s1416, 8
        %s1418 = sadd.s32 %s1417, %s1415
        %s1419 = scalar_lea.vmem [#allocation13], %s1418
        %v1420 = vld [vmem:[%s1419] ss:$8 sm:$0x7]
        %s1421 = scalar_lea.vmem [#allocation2], 3
        %1422 = vst.msk [vmem:[%s1421] ss:$8 sm:$0x7] %vm1358, %v1420
        %1423 = vst.msk [vmem:[%s1421] ss:$8 sm:$0x0] %vm1358, %v1420
        %s1424 = sadd.s32 %s1337, 4
        %s1425 = sshra.s32 %s1424, 7
        %s1426 = sand.u32 %s1424, 127
        %s1427 = sadd.s32 %s1425, %s46
        %s1428 = smul.u32 %s1427, 128
        %s1429 = sshra.s32 %s1424, 7
        %s1430 = sand.u32 %s1424, 127
        %s1431 = sadd.s32 %s1428, %s1430
        %s1432 = sld [smem:[#allocation4 + %s1431]]
        %s1433 = sshra.s32 %s1432, 3
        %s1434 = sand.u32 %s1432, 7
        %s1435 = sshra.s32 %s1432, 3
        %s1436 = sand.u32 %s1432, 7
        %s1437 = smul.u32 %s1433, 3
        %s1438 = smul.u32 %s1437, 8
        %s1439 = sadd.s32 %s1438, %s1436
        %s1440 = scalar_lea.vmem [#allocation13], %s1439
        %v1441 = vld [vmem:[%s1440] ss:$8 sm:$0x7]
        %s1442 = scalar_lea.vmem [#allocation2], 4
        %1443 = vst.msk [vmem:[%s1442] ss:$8 sm:$0x7] %vm1358, %v1441
        %1444 = vst.msk [vmem:[%s1442] ss:$8 sm:$0x0] %vm1358, %v1441
        %s1445 = sadd.s32 %s1337, 5
        %s1446 = sshra.s32 %s1445, 7
        %s1447 = sand.u32 %s1445, 127
        %s1448 = sadd.s32 %s1446, %s46
        %s1449 = smul.u32 %s1448, 128
        %s1450 = sshra.s32 %s1445, 7
        %s1451 = sand.u32 %s1445, 127
        %s1452 = sadd.s32 %s1449, %s1451
        %s1453 = sld [smem:[#allocation4 + %s1452]]
        %s1454 = sshra.s32 %s1453, 3
        %s1455 = sand.u32 %s1453, 7
        %s1456 = sshra.s32 %s1453, 3
        %s1457 = sand.u32 %s1453, 7
        %s1458 = smul.u32 %s1454, 3
        %s1459 = smul.u32 %s1458, 8
        %s1460 = sadd.s32 %s1459, %s1457
        %s1461 = scalar_lea.vmem [#allocation13], %s1460
        %v1462 = vld [vmem:[%s1461] ss:$8 sm:$0x7]
        %s1463 = scalar_lea.vmem [#allocation2], 5
        %1464 = vst.msk [vmem:[%s1463] ss:$8 sm:$0x7] %vm1358, %v1462
        %1465 = vst.msk [vmem:[%s1463] ss:$8 sm:$0x0] %vm1358, %v1462
        %s1466 = sadd.s32 %s1337, 6
        %s1467 = sshra.s32 %s1466, 7
        %s1468 = sand.u32 %s1466, 127
        %s1469 = sadd.s32 %s1467, %s46
        %s1470 = smul.u32 %s1469, 128
        %s1471 = sshra.s32 %s1466, 7
        %s1472 = sand.u32 %s1466, 127
        %s1473 = sadd.s32 %s1470, %s1472
        %s1474 = sld [smem:[#allocation4 + %s1473]]
        %s1475 = sshra.s32 %s1474, 3
        %s1476 = sand.u32 %s1474, 7
        %s1477 = sshra.s32 %s1474, 3
        %s1478 = sand.u32 %s1474, 7
        %s1479 = smul.u32 %s1475, 3
        %s1480 = smul.u32 %s1479, 8
        %s1481 = sadd.s32 %s1480, %s1478
        %s1482 = scalar_lea.vmem [#allocation13], %s1481
        %v1483 = vld [vmem:[%s1482] ss:$8 sm:$0x7]
        %s1484 = scalar_lea.vmem [#allocation2], 6
        %1485 = vst.msk [vmem:[%s1484] ss:$8 sm:$0x7] %vm1358, %v1483
        %1486 = vst.msk [vmem:[%s1484] ss:$8 sm:$0x0] %vm1358, %v1483
        %s1487 = sadd.s32 %s1337, 7
        %s1488 = sshra.s32 %s1487, 7
        %s1489 = sand.u32 %s1487, 127
        %s1490 = sadd.s32 %s1488, %s46
        %s1491 = smul.u32 %s1490, 128
        %s1492 = sshra.s32 %s1487, 7
        %s1493 = sand.u32 %s1487, 127
        %s1494 = sadd.s32 %s1491, %s1493
        %s1495 = sld [smem:[#allocation4 + %s1494]]
        %s1496 = sshra.s32 %s1495, 3
        %s1497 = sand.u32 %s1495, 7
        %s1498 = sshra.s32 %s1495, 3
        %s1499 = sand.u32 %s1495, 7
        %s1500 = smul.u32 %s1496, 3
        %s1501 = smul.u32 %s1500, 8
        %s1502 = sadd.s32 %s1501, %s1499
        %s1503 = scalar_lea.vmem [#allocation13], %s1502
        %v1504 = vld [vmem:[%s1503] ss:$8 sm:$0x7]
        %s1505 = scalar_lea.vmem [#allocation2], 7
        %1506 = vst.msk [vmem:[%s1505] ss:$8 sm:$0x7] %vm1358, %v1504
        %1507 = vst.msk [vmem:[%s1505] ss:$8 sm:$0x0] %vm1358, %v1504
        %v1508 = vld [vmem:[#allocation2] sm:$0xff]
        %v1509 = vld [vmem:[#allocation2 + $0x8] sm:$0xff]
        %v1510 = vld [vmem:[#allocation2 + $0x10] sm:$0xff]
        %v1511 = vld [vmem:[%s10] sm:$0x7]
        %v1513 = vlaneseq
        %v1514 = vshrl.u32 %v1513, 7
        %v1515 = vsub.s32 0, %v1514
        %v1516 = vrot.slane %v1511, %v1515
        %v1517 = vlaneseq
        %v1518 = vshrl.u32 %v1517, 7
        %v1519 = vsub.s32 1, %v1518
        %v1520 = vrot.slane %v1511, %v1519
        %v1521 = vlaneseq
        %v1522 = vshrl.u32 %v1521, 7
        %v1523 = vsub.s32 2, %v1522
        %v1524 = vrot.slane %v1511, %v1523
        %v1528 = vadd.f32 %v1508, %v1516
        %v1529 = vadd.f32 %v1509, %v1520
        %v1530 = vadd.f32 %v1510, %v1524
        %v1531 = vpack.c.bf16 %v1336, %v1336
        %v1532 = vld [vmem:[#allocation14] sm:$0xff]
        %v1533 = vld [vmem:[#allocation14 + $0x8] sm:$0xf]
        %v1534 = vld [vmem:[#allocation14 + $0xc] sm:$0xff]
        %v1535 = vld [vmem:[#allocation14 + $0x14] sm:$0xf]
        %v1536 = vld [vmem:[#allocation14 + $0x18] sm:$0xff]
        %v1537 = vld [vmem:[#allocation14 + $0x20] sm:$0xf]
        %v1538 = vld [vmem:[#allocation14 + $0x24] sm:$0xff]
        %v1539 = vld [vmem:[#allocation14 + $0x2c] sm:$0xf]
        %v1540 = vld [vmem:[#allocation14 + $0x30] sm:$0xff]
        %v1541 = vld [vmem:[#allocation14 + $0x38] sm:$0xf]
        %v1542 = vld [vmem:[#allocation14 + $0x3c] sm:$0xff]
        %v1543 = vld [vmem:[#allocation14 + $0x44] sm:$0xf]
        %v1544 = vld [vmem:[#allocation14 + $0x48] sm:$0xff]
        %v1545 = vld [vmem:[#allocation14 + $0x50] sm:$0xf]
        %v1546 = vld [vmem:[#allocation14 + $0x54] sm:$0xff]
        %v1547 = vld [vmem:[#allocation14 + $0x5c] sm:$0xf]
        %v1548 = vld [vmem:[#allocation14 + $0x60] sm:$0xff]
        %v1549 = vld [vmem:[#allocation14 + $0x68] sm:$0xf]
        %v1550 = vld [vmem:[#allocation14 + $0x6c] sm:$0xff]
        %v1551 = vld [vmem:[#allocation14 + $0x74] sm:$0xf]
        %v1552 = vld [vmem:[#allocation14 + $0x78] sm:$0xff]
        %v1553 = vld [vmem:[#allocation14 + $0x80] sm:$0xf]
        %v1554 = vld [vmem:[#allocation14 + $0x84] sm:$0xff]
        %v1555 = vld [vmem:[#allocation14 + $0x8c] sm:$0xf]
        %v1556 = vld [vmem:[#allocation14 + $0x90] sm:$0xff]
        %v1557 = vld [vmem:[#allocation14 + $0x98] sm:$0xf]
        %v1558 = vld [vmem:[#allocation14 + $0x9c] sm:$0xff]
        %v1559 = vld [vmem:[#allocation14 + $0xa4] sm:$0xf]
        %v1560 = vld [vmem:[#allocation14 + $0xa8] sm:$0xff]
        %v1561 = vld [vmem:[#allocation14 + $0xb0] sm:$0xf]
        %v1562 = vld [vmem:[#allocation14 + $0xb4] sm:$0xff]
        %v1563 = vld [vmem:[#allocation14 + $0xbc] sm:$0xf]
        %v1564 = vld [vmem:[%s12] sm:$0x7]
        %v1566 = vlaneseq
        %v1567 = vshrl.u32 %v1566, 7
        %v1568 = vsub.s32 0, %v1567
        %v1569 = vrot.slane %v1564, %v1568
        %v1570 = vlaneseq
        %v1571 = vshrl.u32 %v1570, 7
        %v1572 = vsub.s32 1, %v1571
        %v1573 = vrot.slane %v1564, %v1572
        %v1574 = vlaneseq
        %v1575 = vshrl.u32 %v1574, 7
        %v1576 = vsub.s32 2, %v1575
        %v1577 = vrot.slane %v1564, %v1576
        %v1613 = vunpack.c.l.b16 %v1532
        %v1614 = vunpack.c.h.b16 %v1532
        %v1615 = vunpack.c.l.b16 %v1533
        %v1616 = vunpack.c.l.b16 %v1534
        %v1617 = vunpack.c.h.b16 %v1534
        %v1618 = vunpack.c.l.b16 %v1535
        %v1619 = vunpack.c.l.b16 %v1536
        %v1620 = vunpack.c.h.b16 %v1536
        %v1621 = vunpack.c.l.b16 %v1537
        %v1622 = vunpack.c.l.b16 %v1538
        %v1623 = vunpack.c.h.b16 %v1538
        %v1624 = vunpack.c.l.b16 %v1539
        %v1625 = vunpack.c.l.b16 %v1540
        %v1626 = vunpack.c.h.b16 %v1540
        %v1627 = vunpack.c.l.b16 %v1541
        %v1628 = vunpack.c.l.b16 %v1542
        %v1629 = vunpack.c.h.b16 %v1542
        %v1630 = vunpack.c.l.b16 %v1543
        %v1631 = vunpack.c.l.b16 %v1544
        %v1632 = vunpack.c.h.b16 %v1544
        %v1633 = vunpack.c.l.b16 %v1545
        %v1634 = vunpack.c.l.b16 %v1546
        %v1635 = vunpack.c.h.b16 %v1546
        %v1636 = vunpack.c.l.b16 %v1547
        %v1637 = vunpack.c.l.b16 %v1548
        %v1638 = vunpack.c.h.b16 %v1548
        %v1639 = vunpack.c.l.b16 %v1549
        %v1640 = vunpack.c.l.b16 %v1550
        %v1641 = vunpack.c.h.b16 %v1550
        %v1642 = vunpack.c.l.b16 %v1551
        %v1643 = vunpack.c.l.b16 %v1552
        %v1644 = vunpack.c.h.b16 %v1552
        %v1645 = vunpack.c.l.b16 %v1553
        %v1646 = vunpack.c.l.b16 %v1554
        %v1647 = vunpack.c.h.b16 %v1554
        %v1648 = vunpack.c.l.b16 %v1555
        %v1649 = vunpack.c.l.b16 %v1556
        %v1650 = vunpack.c.h.b16 %v1556
        %v1651 = vunpack.c.l.b16 %v1557
        %v1652 = vunpack.c.l.b16 %v1558
        %v1653 = vunpack.c.h.b16 %v1558
        %v1654 = vunpack.c.l.b16 %v1559
        %v1655 = vunpack.c.l.b16 %v1560
        %v1656 = vunpack.c.h.b16 %v1560
        %v1657 = vunpack.c.l.b16 %v1561
        %v1658 = vunpack.c.l.b16 %v1562
        %v1659 = vunpack.c.h.b16 %v1562
        %v1660 = vunpack.c.l.b16 %v1563
        %v1661 = vpack.c.b16 %v1616, %v1613
        %v1662 = vpack.c.b16 %v1617, %v1614
        %v1663 = vpack.c.b16 %v1618, %v1615
        %v1664 = vpack.c.b16 %v1622, %v1619
        %v1665 = vpack.c.b16 %v1623, %v1620
        %v1666 = vpack.c.b16 %v1624, %v1621
        %v1667 = vpack.c.b16 %v1628, %v1625
        %v1668 = vpack.c.b16 %v1629, %v1626
        %v1669 = vpack.c.b16 %v1630, %v1627
        %v1670 = vpack.c.b16 %v1634, %v1631
        %v1671 = vpack.c.b16 %v1635, %v1632
        %v1672 = vpack.c.b16 %v1636, %v1633
        %v1673 = vpack.c.b16 %v1640, %v1637
        %v1674 = vpack.c.b16 %v1641, %v1638
        %v1675 = vpack.c.b16 %v1642, %v1639
        %v1676 = vpack.c.b16 %v1646, %v1643
        %v1677 = vpack.c.b16 %v1647, %v1644
        %v1678 = vpack.c.b16 %v1648, %v1645
        %v1679 = vpack.c.b16 %v1652, %v1649
        %v1680 = vpack.c.b16 %v1653, %v1650
        %v1681 = vpack.c.b16 %v1654, %v1651
        %v1682 = vpack.c.b16 %v1658, %v1655
        %v1683 = vpack.c.b16 %v1659, %v1656
        %v1684 = vpack.c.b16 %v1660, %v1657
        %1709 = vmatprep.subr.bf16.mxu0 %v1662
        %1710 = vmatpush1.bf16.msra.mxu0 %v1661
        %1711 = vmatprep.subr.bf16.mxu0 %v1665
        %1712 = vmatpush1.bf16.msra.mxu0 %v1664
        %1713 = vmatprep.subr.bf16.mxu0 %v1668
        %1714 = vmatpush1.bf16.msra.mxu0 %v1667
        %1715 = vmatprep.subr.bf16.mxu0 %v1671
        %1716 = vmatpush1.bf16.msra.mxu0 %v1670
        %1717 = vmatprep.subr.bf16.mxu0 %v1674
        %1718 = vmatpush1.bf16.msra.mxu0 %v1673
        %1719 = vmatprep.subr.bf16.mxu0 %v1677
        %1720 = vmatpush1.bf16.msra.mxu0 %v1676
        %1721 = vmatprep.subr.bf16.mxu0 %v1680
        %1722 = vmatpush1.bf16.msra.mxu0 %v1679
        %1723 = vmatprep.subr.bf16.mxu0 %v1683
        %1724 = vmatpush1.bf16.msra.mxu0 %v1682
        %1725 = vmatprep.subr.bf16.mxu0 0
        %1726 = vmatpush1.bf16.msra.mxu0 0
        %1727 = vmatprep.subr.bf16.mxu0 0
        %1728 = vmatpush1.bf16.msra.mxu0 0
        %1729 = vmatprep.subr.bf16.mxu0 0
        %1730 = vmatpush1.bf16.msra.mxu0 0
        %1731 = vmatprep.subr.bf16.mxu0 0
        %1732 = vmatpush1.bf16.msra.mxu0 0
        %1733 = vmatprep.subr.bf16.mxu0 0
        %1734 = vmatpush1.bf16.msra.mxu0 0
        %1735 = vmatprep.subr.bf16.mxu0 0
        %1736 = vmatpush1.bf16.msra.mxu0 0
        %1737 = vmatprep.subr.bf16.mxu0 0
        %1738 = vmatpush1.bf16.msra.mxu0 0
        %1739 = vmatprep.subr.bf16.mxu0 0
        %1740 = vmatpush1.bf16.msra.mxu0 0
        %1741 = vmatprep.mubr.bf16.mxu0 0
        %1742 = vmatmul.mubr.bf16.gmra.mrb[0].mxu0 %v1531
        %v1743 = vpop.f32.mrb[0].mxu0
        %v1744 = vadd.f32 %v1569, %v1743
        %v1745 = vpop.f32.mrb[0].mxu0
        %v1746 = vadd.f32 %v1573, %v1745
        %v1747 = vpop.f32.mrb[0].mxu0
        %v1748 = vpop.f32.mrb[0].mxu0
        %1749 = vdwg.mxu0
        %1750 = vmatprep.subr.bf16.mxu0 0
        %1751 = vmatpush1.bf16.msra.mxu0 %v1663
        %1752 = vmatprep.subr.bf16.mxu0 0
        %1753 = vmatpush1.bf16.msra.mxu0 %v1666
        %1754 = vmatprep.subr.bf16.mxu0 0
        %1755 = vmatpush1.bf16.msra.mxu0 %v1669
        %1756 = vmatprep.subr.bf16.mxu0 0
        %1757 = vmatpush1.bf16.msra.mxu0 %v1672
        %1758 = vmatprep.subr.bf16.mxu0 0
        %1759 = vmatpush1.bf16.msra.mxu0 %v1675
        %1760 = vmatprep.subr.bf16.mxu0 0
        %1761 = vmatpush1.bf16.msra.mxu0 %v1678
        %1762 = vmatprep.subr.bf16.mxu0 0
        %1763 = vmatpush1.bf16.msra.mxu0 %v1681
        %1764 = vmatprep.subr.bf16.mxu0 0
        %1765 = vmatpush1.bf16.msra.mxu0 %v1684
        %1766 = vmatprep.subr.bf16.mxu0 0
        %1767 = vmatpush1.bf16.msra.mxu0 0
        %1768 = vmatprep.subr.bf16.mxu0 0
        %1769 = vmatpush1.bf16.msra.mxu0 0
        %1770 = vmatprep.subr.bf16.mxu0 0
        %1771 = vmatpush1.bf16.msra.mxu0 0
        %1772 = vmatprep.subr.bf16.mxu0 0
        %1773 = vmatpush1.bf16.msra.mxu0 0
        %1774 = vmatprep.subr.bf16.mxu0 0
        %1775 = vmatpush1.bf16.msra.mxu0 0
        %1776 = vmatprep.subr.bf16.mxu0 0
        %1777 = vmatpush1.bf16.msra.mxu0 0
        %1778 = vmatprep.subr.bf16.mxu0 0
        %1779 = vmatpush1.bf16.msra.mxu0 0
        %1780 = vmatprep.subr.bf16.mxu0 0
        %1781 = vmatpush1.bf16.msra.mxu0 0
        %1782 = vmatprep.mubr.bf16.mxu0 0
        %1783 = vmatmul.mubr.bf16.gmra.mrb[0].mxu0 %v1531
        %v1784 = vpop.f32.mrb[0].mxu0
        %v1785 = vadd.f32 %v1577, %v1784
        %v1786 = vpop.f32.mrb[0].mxu0
        %v1787 = vpop.f32.mrb[0].mxu0
        %v1788 = vpop.f32.mrb[0].mxu0
        %1789 = vdwg.mxu0
        %v1790 = vadd.f32 %v1528, %v1744
        %v1791 = vxor.u32 %v1790, 2147483648
        %v1792 = vmul.f32 %v1791, 1.442695
        %v1793 = vpow.pop %v1792
        %v1794 = vadd.f32 %v1793, 1.0
        %v1795 = vrcp.pop %v1794
        %v1796 = vmul.f32 1.0, %v1795
        %v1797 = vadd.f32 %v1529, %v1746
        %v1798 = vxor.u32 %v1797, 2147483648
        %v1799 = vmul.f32 %v1798, 1.442695
        %v1800 = vpow.pop %v1799
        %v1801 = vadd.f32 %v1800, 1.0
        %v1802 = vrcp.pop %v1801
        %v1803 = vmul.f32 1.0, %v1802
        %v1804 = vmul.f32 %v1796, %v1785
        %v1805 = vadd.f32 %v1530, %v1804
        %v1806 = vtanh.pop %v1805
        %v1807 = vsub.f32 1.0, %v1803
        %v1808 = vmul.f32 %v1807, %v1806
        %v1809 = vmul.f32 %v1803, %v1336
        %v1810 = vadd.f32 %v1808, %v1809
        %v1811 = vpack.c.bf16 %v1810, %v1810
        %v1812 = vld [vmem:[%s13] sm:$0xf]
        %v1813 = vld [vmem:[%s13 + $0x4] sm:$0xf]
        %v1814 = vld [vmem:[%s13 + $0x8] sm:$0xf]
        %v1815 = vld [vmem:[%s13 + $0xc] sm:$0xf]
        %v1816 = vld [vmem:[%s13 + $0x10] sm:$0xf]
        %v1817 = vld [vmem:[%s13 + $0x14] sm:$0xf]
        %v1818 = vld [vmem:[%s13 + $0x18] sm:$0xf]
        %v1819 = vld [vmem:[%s13 + $0x1c] sm:$0xf]
        %v1820 = vld [vmem:[%s13 + $0x20] sm:$0xf]
        %v1821 = vld [vmem:[%s13 + $0x24] sm:$0xf]
        %v1822 = vld [vmem:[%s13 + $0x28] sm:$0xf]
        %v1823 = vld [vmem:[%s13 + $0x2c] sm:$0xf]
        %v1824 = vld [vmem:[%s13 + $0x30] sm:$0xf]
        %v1825 = vld [vmem:[%s13 + $0x34] sm:$0xf]
        %v1826 = vld [vmem:[%s13 + $0x38] sm:$0xf]
        %v1827 = vld [vmem:[%s13 + $0x3c] sm:$0xf]
        %v1828 = vld [vmem:[%s14] sm:$0x1]
        %v1830 = vlaneseq
        %v1831 = vshrl.u32 %v1830, 7
        %v1832 = vsub.s32 0, %v1831
        %v1833 = vrot.slane %v1828, %v1832
        %v1851 = vunpack.c.l.b16 %v1812
        %v1852 = vunpack.c.l.b16 %v1813
        %v1853 = vunpack.c.l.b16 %v1814
        %v1854 = vunpack.c.l.b16 %v1815
        %v1855 = vunpack.c.l.b16 %v1816
        %v1856 = vunpack.c.l.b16 %v1817
        %v1857 = vunpack.c.l.b16 %v1818
        %v1858 = vunpack.c.l.b16 %v1819
        %v1859 = vunpack.c.l.b16 %v1820
        %v1860 = vunpack.c.l.b16 %v1821
        %v1861 = vunpack.c.l.b16 %v1822
        %v1862 = vunpack.c.l.b16 %v1823
        %v1863 = vunpack.c.l.b16 %v1824
        %v1864 = vunpack.c.l.b16 %v1825
        %v1865 = vunpack.c.l.b16 %v1826
        %v1866 = vunpack.c.l.b16 %v1827
        %v1867 = vpack.c.b16 %v1852, %v1851
        %v1868 = vpack.c.b16 %v1854, %v1853
        %v1869 = vpack.c.b16 %v1856, %v1855
        %v1870 = vpack.c.b16 %v1858, %v1857
        %v1871 = vpack.c.b16 %v1860, %v1859
        %v1872 = vpack.c.b16 %v1862, %v1861
        %v1873 = vpack.c.b16 %v1864, %v1863
        %v1874 = vpack.c.b16 %v1866, %v1865
        %1883 = vmatprep.subr.bf16.mxu0 0
        %1884 = vmatpush1.bf16.msra.mxu0 %v1867
        %1885 = vmatprep.subr.bf16.mxu0 0
        %1886 = vmatpush1.bf16.msra.mxu0 %v1868
        %1887 = vmatprep.subr.bf16.mxu0 0
        %1888 = vmatpush1.bf16.msra.mxu0 %v1869
        %1889 = vmatprep.subr.bf16.mxu0 0
        %1890 = vmatpush1.bf16.msra.mxu0 %v1870
        %1891 = vmatprep.subr.bf16.mxu0 0
        %1892 = vmatpush1.bf16.msra.mxu0 %v1871
        %1893 = vmatprep.subr.bf16.mxu0 0
        %1894 = vmatpush1.bf16.msra.mxu0 %v1872
        %1895 = vmatprep.subr.bf16.mxu0 0
        %1896 = vmatpush1.bf16.msra.mxu0 %v1873
        %1897 = vmatprep.subr.bf16.mxu0 0
        %1898 = vmatpush1.bf16.msra.mxu0 %v1874
        %1899 = vmatprep.subr.bf16.mxu0 0
        %1900 = vmatpush1.bf16.msra.mxu0 0
        %1901 = vmatprep.subr.bf16.mxu0 0
        %1902 = vmatpush1.bf16.msra.mxu0 0
        %1903 = vmatprep.subr.bf16.mxu0 0
        %1904 = vmatpush1.bf16.msra.mxu0 0
        %1905 = vmatprep.subr.bf16.mxu0 0
        %1906 = vmatpush1.bf16.msra.mxu0 0
        %1907 = vmatprep.subr.bf16.mxu0 0
        %1908 = vmatpush1.bf16.msra.mxu0 0
        %1909 = vmatprep.subr.bf16.mxu0 0
        %1910 = vmatpush1.bf16.msra.mxu0 0
        %1911 = vmatprep.subr.bf16.mxu0 0
        %1912 = vmatpush1.bf16.msra.mxu0 0
        %1913 = vmatprep.subr.bf16.mxu0 0
        %1914 = vmatpush1.bf16.msra.mxu0 0
        %1915 = vmatprep.mubr.bf16.mxu0 0
        %1916 = vmatmul.mubr.bf16.gmra.mrb[0].mxu0 %v1811
        %v1917 = vpop.f32.mrb[0].mxu0
        %v1918 = vadd.f32 %v1833, %v1917
        %v1919 = vpop.f32.mrb[0].mxu0
        %v1920 = vpop.f32.mrb[0].mxu0
        %v1921 = vpop.f32.mrb[0].mxu0
        %1922 = vdwg.mxu0
        %v1923 = vtanh.pop %v1918
        %1924 = vst [vmem:[%s658] sm:$0xff] %v1923
        %1925 = vst [vmem:[#allocation17] sm:$0xff] %v1810
        %1926 = vst [vmem:[#allocation19] sm:$0xff] %v1219
        %s1927 = sand.u32 %s381, 1
        %s1928 = scalar_lea.sflag [#allocation7], %s1927
        %s1929 = sand.u32 %s381, 1
        %s1930 = smul.addr %s1929, 8
        %s1931 = scalar_lea.vmem [#allocation16], %s1930
        // Predicated region
        $region105: #{tpu_custom_call.1} parent=75 // pred_check
          %p1932 = pneg %p391
        $region106: #{tpu_custom_call.1} parent=75 // pred_check_branch
          %1934 = sbr.rel (%p1932) target = $region108
        $region107: #{tpu_custom_call.1} parent=75 // pred_region
          %s1936 = ssub.s32 128, 128
          %1937 = vsyncadd %s1928, %s1936
          %s1938 = sadd.s32 %s45, %s46
          %s1939 = smul.addr %s1938, 128
          %s1940 = scalar_lea.hbm %s15, %s1939
          %s1942 = sshll.u32 %s1931, 4
          %s1943 = int_to_ptr.vmem [resolvable:$true] %s1942
          %1945 = dma.vmem_to_hbm [thread:$0]  %s1943, 128, %s1940, %s1928
        $region108: #{tpu_custom_call.1} parent=75 // pred_fallthru
          _
        // Predicated region
        $region109: #{tpu_custom_call.1} parent=75 // pred_check
          %p1946 = pneg %p417
        $region110: #{tpu_custom_call.1} parent=75 // pred_check_branch
          %1948 = sbr.rel (%p1946) target = $region112
        $region111: #{tpu_custom_call.1} parent=75 // pred_region
          %s1950 = ssub.s32 128, 128
          %1951 = vsyncadd [#allocation18], %s1950
          %s1952 = smul.addr %s45, 128
          %s1953 = scalar_lea.hbm %s16, %s1952
          %s1955 = sshll.u32 [#allocation17], 4
          %s1956 = int_to_ptr.vmem [resolvable:$true] %s1955
          %1958 = dma.vmem_to_hbm [thread:$0]  %s1956, 128, %s1953, [#allocation18]
        $region112: #{tpu_custom_call.1} parent=75 // pred_fallthru
          _
        // Predicated region
        $region113: #{tpu_custom_call.1} parent=75 // pred_check
          %p1959 = pneg %p443
        $region114: #{tpu_custom_call.1} parent=75 // pred_check_branch
          %1961 = sbr.rel (%p1959) target = $region116
        $region115: #{tpu_custom_call.1} parent=75 // pred_region
          %s1963 = ssub.s32 128, 128
          %1964 = vsyncadd [#allocation18], %s1963
          %s1965 = smul.addr %s45, 128
          %s1966 = scalar_lea.hbm %s17, %s1965
          %s1968 = sshll.u32 [#allocation19], 4
          %s1969 = int_to_ptr.vmem [resolvable:$true] %s1968
          %1971 = dma.vmem_to_hbm [thread:$0]  %s1969, 128, %s1966, [#allocation18]
        $region116: #{tpu_custom_call.1} parent=75 // pred_fallthru
          _
        // Predicated region
        $region117: #{tpu_custom_call.1} parent=75 // pred_check
          %p1972 = pneg %p417
        $region118: #{tpu_custom_call.1} parent=75 // pred_check_branch
          %1974 = sbr.rel (%p1972) target = $region120
        $region119: #{tpu_custom_call.1} parent=75 // pred_region
          %1975 = dma.done [#allocation18], 128
        $region120: #{tpu_custom_call.1} parent=75 // pred_fallthru
          _
        // Predicated region
        $region121: #{tpu_custom_call.1} parent=75 // pred_check
          %p1976 = pneg %p443
        $region122: #{tpu_custom_call.1} parent=75 // pred_check_branch
          %1978 = sbr.rel (%p1976) target = $region124
        $region123: #{tpu_custom_call.1} parent=75 // pred_region
          %1979 = dma.done [#allocation18], 128
        $region124: #{tpu_custom_call.1} parent=75 // pred_fallthru
          _
      $region76: #{tpu_custom_call.1} parent=5 // pred_fallthru
        _
      %p1980 = scmp.le.s32.totalorder 2, %s36
      // Predicated region
      $region125: #{tpu_custom_call.1} parent=5 // pred_check
        %p1981 = pneg %p1980
      $region126: #{tpu_custom_call.1} parent=5 // pred_check_branch
        %1983 = sbr.rel (%p1981) target = $region128
      $region127: #{tpu_custom_call.1} parent=5 // pred_region
        %s1984 = ssub.s32 %s36, 2
        // Predicated region
        $region129: #{tpu_custom_call.1} parent=127 // pred_check
          %p1985 = pneg %p397
        $region130: #{tpu_custom_call.1} parent=127 // pred_check_branch
          %1987 = sbr.rel (%p1985) target = $region132
        $region131: #{tpu_custom_call.1} parent=127 // pred_region
          %s1988 = sand.u32 %s382, 1
          %s1989 = scalar_lea.sflag [#allocation7], %s1988
          %s1990 = sand.u32 %s382, 1
          %s1991 = smul.addr %s1990, 8
          %s1992 = scalar_lea.vmem [#allocation16], %s1991
          %1993 = dma.done %s1989, 128
        $region132: #{tpu_custom_call.1} parent=127 // pred_fallthru
          _
      $region128: #{tpu_custom_call.1} parent=5 // pred_fallthru
        _
    $region6: #{tpu_custom_call.1} parent=1 // loop_footer
      %s40 = sadd.s32 1, %s36
    $region7: #{tpu_custom_call.1} parent=1 // loop_footer_branch
      %35 = sbr.rel target = $region3
    $region8: #{tpu_custom_call.1} parent=1 // loop_exit
      _
    %1994 = vsyncpa [#allocation6], 1
    %s1995 = scalar_lea.sflag [#allocation6], 1
    %1996 = vsyncpa %s1995, 1
    %1997 = vsyncpa [#allocation9], 1
    %1998 = vsyncpa [#allocation12], 1
    %1999 = vsyncpa [#allocation15], 1
    %2000 = vsyncpa [#allocation7], 1
    %s2001 = scalar_lea.sflag [#allocation7], 1
    %2002 = vsyncpa %s2001, 1
    %2003 = vsyncpa [#allocation18], 1

</llo_original>
